<compile_context>
chip_gen: v7x
topology: tpu7x:2x2x1
jax: 0.10.0
libtpu: 0.0.40
codegen_flags: <defaults>
</compile_context>

<pallas_src>
import functools
import math

import jax
import jax.numpy as jnp
from jax.experimental import pallas as pl
from jax.experimental.pallas import tpu as pltpu


def _layer_norm(h, gamma, beta, eps):
    mu = jnp.mean(h, axis=-1, keepdims=True)
    c = h - mu
    var = jnp.mean(c * c, axis=-1, keepdims=True)
    return c * jax.lax.rsqrt(var + eps) * gamma + beta


def _encoder_layer_kernel(
        x_ref,
        wq_ref, bq_ref, wk_ref, bk_ref, wv_ref, bv_ref,
        wo_ref, bo_ref,
        ln1_g_ref, ln1_b_ref,
        w1_ref, fb1_ref, w2_ref, fb2_ref,
        ln2_g_ref, ln2_b_ref,
        out_ref,
        *, num_heads, head_dim, tq, tk, seq_len, eps):
    H, D = num_heads, head_dim

    qi = pl.program_id(1)
    q_start = pl.multiple_of(qi * tq, tq)

    # Current query tile (TQ, E): f32 copy for residual/layernorm, bf16 copy for MXU.
    x_q = x_ref[0, pl.ds(q_start, tq), :]
    x_q_bf = x_q.astype(jnp.bfloat16)

    # ---- q projection: x @ Wq (weights pre-transposed host-side), f32 accumulate ----
    q2d = jnp.dot(x_q_bf, wq_ref[...],
                  preferred_element_type=jnp.float32) + bq_ref[...]
    scale = 1.0 / math.sqrt(D)
    # Head split on the activation tile: (TQ, E) -> (H, TQ, D); 1/sqrt(D) folded into q.
    qh = (q2d * scale).reshape(tq, H, D).transpose(1, 0, 2).astype(jnp.bfloat16)

    # ---- flash-style attention: stream K/V blocks, online softmax ----
    nk = seq_len // tk

    def kv_block(i, carry):
        m, l, acc = carry
        k_start = pl.multiple_of(i * tk, tk)
        x_kv = x_ref[0, pl.ds(k_start, tk), :].astype(jnp.bfloat16)        # (TK, E)

        k2d = jnp.dot(x_kv, wk_ref[...],
                      preferred_element_type=jnp.float32) + bk_ref[...]
        v2d = jnp.dot(x_kv, wv_ref[...],
                      preferred_element_type=jnp.float32) + bv_ref[...]
        kh = k2d.reshape(tk, H, D).transpose(1, 0, 2).astype(jnp.bfloat16)  # (H,TK,D)
        vh = v2d.reshape(tk, H, D).transpose(1, 0, 2).astype(jnp.bfloat16)

        s = jnp.einsum('hqd,hkd->hqk', qh, kh,
                       preferred_element_type=jnp.float32)                  # (H,TQ,TK)

        m_new = jnp.maximum(m, s.max(axis=-1, keepdims=True))
        alpha = jnp.exp(m - m_new)
        p = jnp.exp(s - m_new)
        l_new = alpha * l + p.sum(axis=-1, keepdims=True)
        acc_new = alpha * acc + jnp.einsum('hqk,hkd->hqd', p.astype(jnp.bfloat16),
                                           vh, preferred_element_type=jnp.float32)
        return m_new, l_new, acc_new

    m0 = jnp.full((H, tq, 1), -jnp.inf, jnp.float32)
    l0 = jnp.zeros((H, tq, 1), jnp.float32)
    a0 = jnp.zeros((H, tq, D), jnp.float32)
    _, l, acc = jax.lax.fori_loop(0, nk, kv_block, (m0, l0, a0))

    # Softmax normalisation on the EUP slot instead of a VALU divide.
    ctx = acc * pl.reciprocal(l, approx=True)                               # (H,TQ,D)

    # ---- head merge + output projection ----
    ctx2d = ctx.transpose(1, 0, 2).reshape(tq, H * D).astype(jnp.bfloat16)
    attn = jnp.dot(ctx2d, wo_ref[...],
                   preferred_element_type=jnp.float32) + bo_ref[...]        # (TQ, E)

    # dropout(p) is the identity in eval mode.
    # TODO(synk): train-mode dropout would use pltpu.prng_seed / stateful_bernoulli.

    h1 = _layer_norm(attn + x_q, ln1_g_ref[...], ln1_b_ref[...], eps)

    # ---- feed-forward: Linear -> ReLU -> Linear (weights pre-transposed) ----
    f = jnp.dot(h1.astype(jnp.bfloat16), w1_ref[...],
                preferred_element_type=jnp.float32) + fb1_ref[...]
    f = jnp.maximum(f, 0.0)
    f = jnp.dot(f.astype(jnp.bfloat16), w2_ref[...],
                preferred_element_type=jnp.float32) + fb2_ref[...]

    # The reference module computes norm2(out + out) -- adds the FFN output to itself.
    y = _layer_norm(f + f, ln2_g_ref[...], ln2_b_ref[...], eps)

    out_ref[0] = y.astype(out_ref.dtype)


def _pick_tile(n, cap):
    """Largest divisor of n that is <= cap and a multiple of 8 (else n itself)."""
    if n <= cap:
        return n
    for d in range(cap, 0, -1):
        if n % d == 0 and d % 8 == 0:
            return d
    return n


def encoder_layer(x, params, num_heads, *, eps=1e-5, q_block=128, k_block=512):
    """x: (B, S, E) float32; params in PyTorch layout. Returns (B, S, E)."""
    B, S, E = x.shape
    H = num_heads
    D = E // H
    (wq, bq, wk, bk, wv, bv, wo, bo,
     ln1_g, ln1_b, w1, fb1, w2, fb2, ln2_g, ln2_b) = params
    FF = w1.shape[0]

    # Host-side layout plumbing (free): pre-transpose weights to (in, out), cast the
    # MXU operands to bf16; biases / layernorm params stay f32 as (1, N) rows.
    bf = lambda a: a.astype(jnp.bfloat16)
    row = lambda a: a.reshape(1, -1).astype(jnp.float32)
    wq_t, wk_t, wv_t, wo_t = bf(wq.T), bf(wk.T), bf(wv.T), bf(wo.T)       # (E, E)
    w1_t, w2_t = bf(w1.T), bf(w2.T)                                       # (E,FF),(FF,E)
    bq_r, bk_r, bv_r, bo_r = row(bq), row(bk), row(bv), row(bo)
    fb1_r, fb2_r = row(fb1), row(fb2)
    g1_r, b1n_r, g2_r, b2n_r = row(ln1_g), row(ln1_b), row(ln2_g), row(ln2_b)

    tq = _pick_tile(S, q_block)
    tk = _pick_tile(S, k_block)
    grid = (B, S // tq)

    def const(shape):
        return pl.BlockSpec(shape, lambda b, qi: (0,) * len(shape))

    kernel = functools.partial(
        _encoder_layer_kernel, num_heads=H, head_dim=D, tq=tq, tk=tk,
        seq_len=S, eps=eps)

    cost = pl.CostEstimate(
        flops=int(2 * B * S * E * E * 4 + 4 * B * H * S * S * D + 4 * B * S * E * FF),
        transcendentals=int(B * H * S * S + 4 * B * S),
        bytes_accessed=int(2 * x.size * 4 + (4 * E * E + 2 * E * FF) * 2
                           + (6 * E + 2 * FF) * 4))

    return pl.pallas_call(
        kernel,
        out_shape=jax.ShapeDtypeStruct((B, S, E), x.dtype),
        grid_spec=pltpu.PrefetchScalarGridSpec(
            num_scalar_prefetch=0,
            grid=grid,
            in_specs=[
                pl.BlockSpec((1, S, E), lambda b, qi: (b, 0, 0)),  # x (full seq for K/V)
                const((E, E)), const((1, E)),      # q proj
                const((E, E)), const((1, E)),      # k proj
                const((E, E)), const((1, E)),      # v proj
                const((E, E)), const((1, E)),      # attn output proj
                const((1, E)), const((1, E)),      # layernorm 1
                const((E, FF)), const((1, FF)),    # ffn linear 1
                const((FF, E)), const((1, E)),     # ffn linear 2
                const((1, E)), const((1, E)),      # layernorm 2
            ],
            out_specs=pl.BlockSpec((1, tq, E), lambda b, qi: (b, qi, 0)),
        ),
        compiler_params=pltpu.CompilerParams(
            dimension_semantics=("parallel", "parallel"),
            vmem_limit_bytes=32 * 1024 * 1024),
        cost_estimate=cost,
    )(x, wq_t, bq_r, wk_t, bk_r, wv_t, bv_r, wo_t, bo_r,
      g1_r, b1n_r, w1_t, fb1_r, w2_t, fb2_r, g2_r, b2n_r)


def init_params(key, embedding_size, hidden_size):
    """PyTorch defaults: nn.Linear U(-1/sqrt(in), 1/sqrt(in)); LayerNorm ones/zeros."""
    E, FF = embedding_size, hidden_size

    def linear(k, n_in, n_out):
        kw, kb = jax.random.split(k)
        bound = 1.0 / math.sqrt(n_in)
        w = jax.random.uniform(kw, (n_out, n_in), jnp.float32, -bound, bound)
        b = jax.random.uniform(kb, (n_out,), jnp.float32, -bound, bound)
        return w, b

    ks = jax.random.split(key, 6)
    wq, bq = linear(ks[0], E, E)
    wk, bk = linear(ks[1], E, E)
    wv, bv = linear(ks[2], E, E)
    wo, bo = linear(ks[3], E, E)
    w1, b1 = linear(ks[4], E, FF)
    w2, b2 = linear(ks[5], FF, E)
    ones = jnp.ones((E,), jnp.float32)
    zeros = jnp.zeros((E,), jnp.float32)
    return (wq, bq, wk, bk, wv, bv, wo, bo,
            ones, zeros, w1, b1, w2, b2, ones, zeros)


def _reference(x, params, num_heads, eps=1e-5):
    """Pure-JAX f32 reference reproducing the PyTorch EncoderLayer forward (eval mode)."""
    (wq, bq, wk, bk, wv, bv, wo, bo,
     g1, be1, w1, fb1, w2, fb2, g2, be2) = params
    B, S, E = x.shape
    H = num_heads
    D = E // H

    def ln(h, g, b):
        mu = h.mean(-1, keepdims=True)
        var = ((h - mu) ** 2).mean(-1, keepdims=True)
        return (h - mu) / jnp.sqrt(var + eps) * g + b

    q = (x @ wq.T + bq).reshape(B, S, H, D).transpose(0, 2, 1, 3)
    k = (x @ wk.T + bk).reshape(B, S, H, D).transpose(0, 2, 1, 3)
    v = (x @ wv.T + bv).reshape(B, S, H, D).transpose(0, 2, 1, 3)
    a = jax.nn.softmax((q @ k.transpose(0, 1, 3, 2)) / jnp.sqrt(jnp.float32(D)), axis=-1)
    attn = (a @ v).transpose(0, 2, 1, 3).reshape(B, S, E) @ wo.T + bo
    h1 = ln(attn + x, g1, be1)                      # dropout == identity in eval
    f = jnp.maximum(h1 @ w1.T + fb1, 0.0) @ w2.T + fb2
    return ln(f + f, g2, be2)                       # module adds f to itself


if __name__ == "__main__":
    # Small but lane-dense shapes: E multiple of 128 so output stores are full-lane.
    B, S, E, H, FF = 2, 8, 128, 4, 256

    key = jax.random.PRNGKey(0)
    k_x, k_p = jax.random.split(key)
    x = jax.random.normal(k_x, (B, S, E), jnp.float32)
    params = init_params(k_p, E, FF)

    out = encoder_layer(x, params, H)
    out = jax.block_until_ready(out)

    ref = _reference(x, params, H)
    assert out.shape == (B, S, E)
    max_err = float(jnp.max(jnp.abs(out - ref)))
    # bf16 MXU operands (f32 accumulation) => tolerance loosened vs the f32 reference.
    assert jnp.allclose(out, ref, atol=7.5e-2, rtol=7.5e-2), f"max |err| = {max_err}"

    print("KERNEL_OK")
</pallas_src>

<mosaic_0001>
module attributes {stable_mosaic.version = 11 : i64} {
  func.func @_encoder_layer_kernel(%arg0: i32, %arg1: i32, %arg2: memref<1x8x128xf32, #tpu.memory_space<vmem>>, %arg3: memref<128x128xbf16, #tpu.memory_space<vmem>>, %arg4: memref<1x128xf32, #tpu.memory_space<vmem>>, %arg5: memref<128x128xbf16, #tpu.memory_space<vmem>>, %arg6: memref<1x128xf32, #tpu.memory_space<vmem>>, %arg7: memref<128x128xbf16, #tpu.memory_space<vmem>>, %arg8: memref<1x128xf32, #tpu.memory_space<vmem>>, %arg9: memref<128x128xbf16, #tpu.memory_space<vmem>>, %arg10: memref<1x128xf32, #tpu.memory_space<vmem>>, %arg11: memref<1x128xf32, #tpu.memory_space<vmem>>, %arg12: memref<1x128xf32, #tpu.memory_space<vmem>>, %arg13: memref<128x256xbf16, #tpu.memory_space<vmem>>, %arg14: memref<1x256xf32, #tpu.memory_space<vmem>>, %arg15: memref<256x128xbf16, #tpu.memory_space<vmem>>, %arg16: memref<1x128xf32, #tpu.memory_space<vmem>>, %arg17: memref<1x128xf32, #tpu.memory_space<vmem>>, %arg18: memref<1x128xf32, #tpu.memory_space<vmem>>, %arg19: memref<1x8x128xf32, #tpu.memory_space<vmem>>) attributes {dimension_semantics = [#tpu.dimension_semantics<parallel>, #tpu.dimension_semantics<parallel>], iteration_bounds = array<i64: 2, 1>, scalar_prefetch = 0 : i64, scratch_operands = 0 : i64, tpu.core_type = #tpu.core_type<tc>, window_params = [{transform_indices = @transform_0, window_bounds = array<i64: 1, 8, 128>}, {pipeline_mode = #tpu.pipeline_mode<synchronous>, transform_indices = @transform_1, window_bounds = array<i64: 128, 128>}, {pipeline_mode = #tpu.pipeline_mode<synchronous>, transform_indices = @transform_2, window_bounds = array<i64: 1, 128>}, {pipeline_mode = #tpu.pipeline_mode<synchronous>, transform_indices = @transform_3, window_bounds = array<i64: 128, 128>}, {pipeline_mode = #tpu.pipeline_mode<synchronous>, transform_indices = @transform_4, window_bounds = array<i64: 1, 128>}, {pipeline_mode = #tpu.pipeline_mode<synchronous>, transform_indices = @transform_5, window_bounds = array<i64: 128, 128>}, {pipeline_mode = #tpu.pipeline_mode<synchronous>, transform_indices = @transform_6, window_bounds = array<i64: 1, 128>}, {pipeline_mode = #tpu.pipeline_mode<synchronous>, transform_indices = @transform_7, window_bounds = array<i64: 128, 128>}, {pipeline_mode = #tpu.pipeline_mode<synchronous>, transform_indices = @transform_8, window_bounds = array<i64: 1, 128>}, {pipeline_mode = #tpu.pipeline_mode<synchronous>, transform_indices = @transform_9, window_bounds = array<i64: 1, 128>}, {pipeline_mode = #tpu.pipeline_mode<synchronous>, transform_indices = @transform_10, window_bounds = array<i64: 1, 128>}, {pipeline_mode = #tpu.pipeline_mode<synchronous>, transform_indices = @transform_11, window_bounds = array<i64: 128, 256>}, {pipeline_mode = #tpu.pipeline_mode<synchronous>, transform_indices = @transform_12, window_bounds = array<i64: 1, 256>}, {pipeline_mode = #tpu.pipeline_mode<synchronous>, transform_indices = @transform_13, window_bounds = array<i64: 256, 128>}, {pipeline_mode = #tpu.pipeline_mode<synchronous>, transform_indices = @transform_14, window_bounds = array<i64: 1, 128>}, {pipeline_mode = #tpu.pipeline_mode<synchronous>, transform_indices = @transform_15, window_bounds = array<i64: 1, 128>}, {pipeline_mode = #tpu.pipeline_mode<synchronous>, transform_indices = @transform_16, window_bounds = array<i64: 1, 128>}, {transform_indices = @transform_17, window_bounds = array<i64: 1, 8, 128>}]} {
    %c8_i32 = arith.constant 8 : i32
    %0 = arith.muli %arg1, %c8_i32 : i32
    %1 = tpu.assume_multiple %0, 8 : i32
    %c0 = arith.constant 0 : index
    %2 = arith.index_cast %1 : i32 to index
    %c0_0 = arith.constant 0 : index
    %3 = vector.load %arg2[%c0, %2, %c0_0] : memref<1x8x128xf32, #tpu.memory_space<vmem>>, vector<1x8x128xf32>
    %4 = vector.shape_cast %3 : vector<1x8x128xf32> to vector<8x128xf32>
    %5 = arith.truncf %4 : vector<8x128xf32> to vector<8x128xbf16>
    %c0_1 = arith.constant 0 : index
    %c0_2 = arith.constant 0 : index
    %6 = vector.load %arg3[%c0_1, %c0_2] : memref<128x128xbf16, #tpu.memory_space<vmem>>, vector<128x128xbf16>
    %cst = arith.constant dense<0.000000e+00> : vector<8x128xf32>
    %7 = tpu.matmul %5, %6, %cst {dimension_numbers = #tpu.dot_dimension_numbers<[1], [0], [0], [1], [0, 0, 1, 1], [], []>} : vector<8x128xbf16>, vector<128x128xbf16>, vector<8x128xf32> -> vector<8x128xf32>
    %c0_3 = arith.constant 0 : index
    %c0_4 = arith.constant 0 : index
    %8 = vector.load %arg4[%c0_3, %c0_4] : memref<1x128xf32, #tpu.memory_space<vmem>>, vector<1x128xf32>
    %9 = vector.broadcast %8 : vector<1x128xf32> to vector<8x128xf32>
    %10 = arith.addf %7, %9 : vector<8x128xf32>
    %cst_5 = arith.constant 0.176776692 : f32
    %11 = vector.broadcast %cst_5 : f32 to vector<8x128xf32>
    %12 = arith.mulf %10, %11 : vector<8x128xf32>
    %13 = vector.shape_cast %12 : vector<8x128xf32> to vector<8x4x32xf32>
    %14 = tpu.transpose %13, [1, 0, 2] : vector<8x4x32xf32> -> vector<4x8x32xf32>
    %15 = arith.truncf %14 : vector<4x8x32xf32> to vector<4x8x32xbf16>
    %cst_6 = arith.constant 0xFF800000 : f32
    %16 = vector.broadcast %cst_6 : f32 to vector<4x8x1xf32>
    %cst_7 = arith.constant 0.000000e+00 : f32
    %17 = vector.broadcast %cst_7 : f32 to vector<4x8x1xf32>
    %cst_8 = arith.constant 0.000000e+00 : f32
    %18 = vector.broadcast %cst_8 : f32 to vector<4x8x32xf32>
    %c0_i32 = arith.constant 0 : i32
    %c8_i32_9 = arith.constant 8 : i32
    %19 = arith.muli %c0_i32, %c8_i32_9 : i32
    %20 = tpu.assume_multiple %19, 8 : i32
    %c0_10 = arith.constant 0 : index
    %21 = arith.index_cast %20 : i32 to index
    %c0_11 = arith.constant 0 : index
    %22 = vector.load %arg2[%c0_10, %21, %c0_11] : memref<1x8x128xf32, #tpu.memory_space<vmem>>, vector<1x8x128xf32>
    %23 = vector.shape_cast %22 : vector<1x8x128xf32> to vector<8x128xf32>
    %24 = arith.truncf %23 : vector<8x128xf32> to vector<8x128xbf16>
    %c0_12 = arith.constant 0 : index
    %c0_13 = arith.constant 0 : index
    %25 = vector.load %arg5[%c0_12, %c0_13] : memref<128x128xbf16, #tpu.memory_space<vmem>>, vector<128x128xbf16>
    %cst_14 = arith.constant dense<0.000000e+00> : vector<8x128xf32>
    %26 = tpu.matmul %24, %25, %cst_14 {dimension_numbers = #tpu.dot_dimension_numbers<[1], [0], [0], [1], [0, 0, 1, 1], [], []>} : vector<8x128xbf16>, vector<128x128xbf16>, vector<8x128xf32> -> vector<8x128xf32>
    %c0_15 = arith.constant 0 : index
    %c0_16 = arith.constant 0 : index
    %27 = vector.load %arg6[%c0_15, %c0_16] : memref<1x128xf32, #tpu.memory_space<vmem>>, vector<1x128xf32>
    %28 = vector.broadcast %27 : vector<1x128xf32> to vector<8x128xf32>
    %29 = arith.addf %26, %28 : vector<8x128xf32>
    %c0_17 = arith.constant 0 : index
    %c0_18 = arith.constant 0 : index
    %30 = vector.load %arg7[%c0_17, %c0_18] : memref<128x128xbf16, #tpu.memory_space<vmem>>, vector<128x128xbf16>
    %cst_19 = arith.constant dense<0.000000e+00> : vector<8x128xf32>
    %31 = tpu.matmul %24, %30, %cst_19 {dimension_numbers = #tpu.dot_dimension_numbers<[1], [0], [0], [1], [0, 0, 1, 1], [], []>} : vector<8x128xbf16>, vector<128x128xbf16>, vector<8x128xf32> -> vector<8x128xf32>
    %c0_20 = arith.constant 0 : index
    %c0_21 = arith.constant 0 : index
    %32 = vector.load %arg8[%c0_20, %c0_21] : memref<1x128xf32, #tpu.memory_space<vmem>>, vector<1x128xf32>
    %33 = vector.broadcast %32 : vector<1x128xf32> to vector<8x128xf32>
    %34 = arith.addf %31, %33 : vector<8x128xf32>
    %35 = vector.shape_cast %29 : vector<8x128xf32> to vector<8x4x32xf32>
    %36 = tpu.transpose %35, [1, 0, 2] : vector<8x4x32xf32> -> vector<4x8x32xf32>
    %37 = arith.truncf %36 : vector<4x8x32xf32> to vector<4x8x32xbf16>
    %38 = vector.shape_cast %34 : vector<8x128xf32> to vector<8x4x32xf32>
    %39 = tpu.transpose %38, [1, 0, 2] : vector<8x4x32xf32> -> vector<4x8x32xf32>
    %40 = arith.truncf %39 : vector<4x8x32xf32> to vector<4x8x32xbf16>
    "tpu.trace_start"() <{level = 10 : i32, message = "hqd,hkd->hqk"}> : () -> ()
    %cst_22 = arith.constant dense<0.000000e+00> : vector<4x8x8xf32>
    %41 = tpu.matmul %15, %37, %cst_22 {dimension_numbers = #tpu.dot_dimension_numbers<[2], [2], [1], [1], [0, 0, 0, 1, 1, 1], [0], [0]>} : vector<4x8x32xbf16>, vector<4x8x32xbf16>, vector<4x8x8xf32> -> vector<4x8x8xf32>
    "tpu.trace_stop"() : () -> ()
    %cst_23 = arith.constant dense<0xFF800000> : vector<4x8xf32>
    %42 = vector.multi_reduction <maximumf>, %41, %cst_23 [2] : vector<4x8x8xf32> to vector<4x8xf32>
    %43 = vector.shape_cast %42 : vector<4x8xf32> to vector<4x8x1xf32>
    %44 = arith.maximumf %16, %43 : vector<4x8x1xf32>
    %45 = arith.subf %16, %44 : vector<4x8x1xf32>
    %46 = math.exp %45 : vector<4x8x1xf32>
    %47 = vector.broadcast %44 : vector<4x8x1xf32> to vector<4x8x8xf32>
    %48 = arith.subf %41, %47 : vector<4x8x8xf32>
    %49 = math.exp %48 : vector<4x8x8xf32>
    %50 = arith.mulf %46, %17 : vector<4x8x1xf32>
    %cst_24 = arith.constant dense<0.000000e+00> : vector<4x8xf32>
    %51 = vector.multi_reduction <add>, %49, %cst_24 [2] : vector<4x8x8xf32> to vector<4x8xf32>
    %52 = vector.shape_cast %51 : vector<4x8xf32> to vector<4x8x1xf32>
    %53 = arith.addf %50, %52 : vector<4x8x1xf32>
    %54 = vector.broadcast %46 : vector<4x8x1xf32> to vector<4x8x32xf32>
    %55 = arith.mulf %54, %18 : vector<4x8x32xf32>
    %56 = arith.truncf %49 : vector<4x8x8xf32> to vector<4x8x8xbf16>
    "tpu.trace_start"() <{level = 10 : i32, message = "hqk,hkd->hqd"}> : () -> ()
    %cst_25 = arith.constant dense<0.000000e+00> : vector<4x8x32xf32>
    %57 = tpu.matmul %56, %40, %cst_25 {dimension_numbers = #tpu.dot_dimension_numbers<[2], [1], [1], [2], [0, 0, 0, 1, 1, 2], [0], [0]>} : vector<4x8x8xbf16>, vector<4x8x32xbf16>, vector<4x8x32xf32> -> vector<4x8x32xf32>
    "tpu.trace_stop"() : () -> ()
    %58 = arith.addf %55, %57 : vector<4x8x32xf32>
    %c1_i32 = arith.constant 1 : i32
    %59 = tpu.reciprocal %53 {approx = true} : vector<4x8x1xf32> -> vector<4x8x1xf32>
    %60 = vector.broadcast %59 : vector<4x8x1xf32> to vector<4x8x32xf32>
    %61 = arith.mulf %58, %60 : vector<4x8x32xf32>
    %62 = tpu.transpose %61, [1, 0, 2] : vector<4x8x32xf32> -> vector<8x4x32xf32>
    %63 = vector.shape_cast %62 : vector<8x4x32xf32> to vector<8x128xf32>
    %64 = arith.truncf %63 : vector<8x128xf32> to vector<8x128xbf16>
    %c0_26 = arith.constant 0 : index
    %c0_27 = arith.constant 0 : index
    %65 = vector.load %arg9[%c0_26, %c0_27] : memref<128x128xbf16, #tpu.memory_space<vmem>>, vector<128x128xbf16>
    %cst_28 = arith.constant dense<0.000000e+00> : vector<8x128xf32>
    %66 = tpu.matmul %64, %65, %cst_28 {dimension_numbers = #tpu.dot_dimension_numbers<[1], [0], [0], [1], [0, 0, 1, 1], [], []>} : vector<8x128xbf16>, vector<128x128xbf16>, vector<8x128xf32> -> vector<8x128xf32>
    %c0_29 = arith.constant 0 : index
    %c0_30 = arith.constant 0 : index
    %67 = vector.load %arg10[%c0_29, %c0_30] : memref<1x128xf32, #tpu.memory_space<vmem>>, vector<1x128xf32>
    %68 = vector.broadcast %67 : vector<1x128xf32> to vector<8x128xf32>
    %69 = arith.addf %66, %68 : vector<8x128xf32>
    %70 = arith.addf %69, %4 : vector<8x128xf32>
    %c0_31 = arith.constant 0 : index
    %c0_32 = arith.constant 0 : index
    %71 = vector.load %arg11[%c0_31, %c0_32] : memref<1x128xf32, #tpu.memory_space<vmem>>, vector<1x128xf32>
    %c0_33 = arith.constant 0 : index
    %c0_34 = arith.constant 0 : index
    %72 = vector.load %arg12[%c0_33, %c0_34] : memref<1x128xf32, #tpu.memory_space<vmem>>, vector<1x128xf32>
    %cst_35 = arith.constant dense<0.000000e+00> : vector<8xf32>
    %73 = vector.multi_reduction <add>, %70, %cst_35 [1] : vector<8x128xf32> to vector<8xf32>
    %74 = vector.shape_cast %73 : vector<8xf32> to vector<8x1xf32>
    %cst_36 = arith.constant 1.280000e+02 : f32
    %75 = vector.broadcast %cst_36 : f32 to vector<8x1xf32>
    %76 = arith.divf %74, %75 : vector<8x1xf32>
    %77 = vector.broadcast %76 : vector<8x1xf32> to vector<8x128xf32>
    %78 = arith.subf %70, %77 : vector<8x128xf32>
    %79 = arith.mulf %78, %78 : vector<8x128xf32>
    %cst_37 = arith.constant dense<0.000000e+00> : vector<8xf32>
    %80 = vector.multi_reduction <add>, %79, %cst_37 [1] : vector<8x128xf32> to vector<8xf32>
    %81 = vector.shape_cast %80 : vector<8xf32> to vector<8x1xf32>
    %cst_38 = arith.constant 1.280000e+02 : f32
    %82 = vector.broadcast %cst_38 : f32 to vector<8x1xf32>
    %83 = arith.divf %81, %82 : vector<8x1xf32>
    %cst_39 = arith.constant 9.99999974E-6 : f32
    %84 = vector.broadcast %cst_39 : f32 to vector<8x1xf32>
    %85 = arith.addf %83, %84 : vector<8x1xf32>
    %86 = math.rsqrt %85 : vector<8x1xf32>
    %87 = vector.broadcast %86 : vector<8x1xf32> to vector<8x128xf32>
    %88 = arith.mulf %78, %87 : vector<8x128xf32>
    %89 = vector.broadcast %71 : vector<1x128xf32> to vector<8x128xf32>
    %90 = arith.mulf %88, %89 : vector<8x128xf32>
    %91 = vector.broadcast %72 : vector<1x128xf32> to vector<8x128xf32>
    %92 = arith.addf %90, %91 : vector<8x128xf32>
    %93 = arith.truncf %92 : vector<8x128xf32> to vector<8x128xbf16>
    %c0_40 = arith.constant 0 : index
    %c0_41 = arith.constant 0 : index
    %94 = vector.load %arg13[%c0_40, %c0_41] : memref<128x256xbf16, #tpu.memory_space<vmem>>, vector<128x256xbf16>
    %cst_42 = arith.constant dense<0.000000e+00> : vector<8x256xf32>
    %95 = tpu.matmul %93, %94, %cst_42 {dimension_numbers = #tpu.dot_dimension_numbers<[1], [0], [0], [1], [0, 0, 1, 1], [], []>} : vector<8x128xbf16>, vector<128x256xbf16>, vector<8x256xf32> -> vector<8x256xf32>
    %c0_43 = arith.constant 0 : index
    %c0_44 = arith.constant 0 : index
    %96 = vector.load %arg14[%c0_43, %c0_44] : memref<1x256xf32, #tpu.memory_space<vmem>>, vector<1x256xf32>
    %97 = vector.broadcast %96 : vector<1x256xf32> to vector<8x256xf32>
    %98 = arith.addf %95, %97 : vector<8x256xf32>
    %cst_45 = arith.constant 0.000000e+00 : f32
    %99 = vector.broadcast %cst_45 : f32 to vector<8x256xf32>
    %100 = arith.maximumf %98, %99 : vector<8x256xf32>
    %101 = arith.truncf %100 : vector<8x256xf32> to vector<8x256xbf16>
    %c0_46 = arith.constant 0 : index
    %c0_47 = arith.constant 0 : index
    %102 = vector.load %arg15[%c0_46, %c0_47] : memref<256x128xbf16, #tpu.memory_space<vmem>>, vector<256x128xbf16>
    %cst_48 = arith.constant dense<0.000000e+00> : vector<8x128xf32>
    %103 = tpu.matmul %101, %102, %cst_48 {dimension_numbers = #tpu.dot_dimension_numbers<[1], [0], [0], [1], [0, 0, 1, 1], [], []>} : vector<8x256xbf16>, vector<256x128xbf16>, vector<8x128xf32> -> vector<8x128xf32>
    %c0_49 = arith.constant 0 : index
    %c0_50 = arith.constant 0 : index
    %104 = vector.load %arg16[%c0_49, %c0_50] : memref<1x128xf32, #tpu.memory_space<vmem>>, vector<1x128xf32>
    %105 = vector.broadcast %104 : vector<1x128xf32> to vector<8x128xf32>
    %106 = arith.addf %103, %105 : vector<8x128xf32>
    %107 = arith.addf %106, %106 : vector<8x128xf32>
    %c0_51 = arith.constant 0 : index
    %c0_52 = arith.constant 0 : index
    %108 = vector.load %arg17[%c0_51, %c0_52] : memref<1x128xf32, #tpu.memory_space<vmem>>, vector<1x128xf32>
    %c0_53 = arith.constant 0 : index
    %c0_54 = arith.constant 0 : index
    %109 = vector.load %arg18[%c0_53, %c0_54] : memref<1x128xf32, #tpu.memory_space<vmem>>, vector<1x128xf32>
    %cst_55 = arith.constant dense<0.000000e+00> : vector<8xf32>
    %110 = vector.multi_reduction <add>, %107, %cst_55 [1] : vector<8x128xf32> to vector<8xf32>
    %111 = vector.shape_cast %110 : vector<8xf32> to vector<8x1xf32>
    %cst_56 = arith.constant 1.280000e+02 : f32
    %112 = vector.broadcast %cst_56 : f32 to vector<8x1xf32>
    %113 = arith.divf %111, %112 : vector<8x1xf32>
    %114 = vector.broadcast %113 : vector<8x1xf32> to vector<8x128xf32>
    %115 = arith.subf %107, %114 : vector<8x128xf32>
    %116 = arith.mulf %115, %115 : vector<8x128xf32>
    %cst_57 = arith.constant dense<0.000000e+00> : vector<8xf32>
    %117 = vector.multi_reduction <add>, %116, %cst_57 [1] : vector<8x128xf32> to vector<8xf32>
    %118 = vector.shape_cast %117 : vector<8xf32> to vector<8x1xf32>
    %cst_58 = arith.constant 1.280000e+02 : f32
    %119 = vector.broadcast %cst_58 : f32 to vector<8x1xf32>
    %120 = arith.divf %118, %119 : vector<8x1xf32>
    %cst_59 = arith.constant 9.99999974E-6 : f32
    %121 = vector.broadcast %cst_59 : f32 to vector<8x1xf32>
    %122 = arith.addf %120, %121 : vector<8x1xf32>
    %123 = math.rsqrt %122 : vector<8x1xf32>
    %124 = vector.broadcast %123 : vector<8x1xf32> to vector<8x128xf32>
    %125 = arith.mulf %115, %124 : vector<8x128xf32>
    %126 = vector.broadcast %108 : vector<1x128xf32> to vector<8x128xf32>
    %127 = arith.mulf %125, %126 : vector<8x128xf32>
    %128 = vector.broadcast %109 : vector<1x128xf32> to vector<8x128xf32>
    %129 = arith.addf %127, %128 : vector<8x128xf32>
    %c0_60 = arith.constant 0 : index
    %c0_61 = arith.constant 0 : index
    %c0_62 = arith.constant 0 : index
    %130 = vector.load %arg19[%c0_60, %c0_61, %c0_62] : memref<1x8x128xf32, #tpu.memory_space<vmem>>, vector<1x8x128xf32>
    %131 = vector.shape_cast %130 : vector<1x8x128xf32> to vector<8x128xf32>
    %132 = vector.shape_cast %129 : vector<8x128xf32> to vector<1x8x128xf32>
    tpu.vector_store %arg19[%c0_60, %c0_61, %c0_62], %132 {strides = array<i32>} : memref<1x8x128xf32, #tpu.memory_space<vmem>>, vector<1x8x128xf32>,
    return
  }
  func.func @transform_0(%arg0: i32, %arg1: i32) -> (i32, i32, i32) {
    %c0_i32 = arith.constant 0 : i32
    %c0_i32_0 = arith.constant 0 : i32
    %c0_i32_1 = arith.constant 0 : i32
    return %arg0, %c0_i32, %c0_i32_0 : i32, i32, i32
  }
  func.func @transform_1(%arg0: i32, %arg1: i32) -> (i32, i32) {
    %c0_i32 = arith.constant 0 : i32
    %c0_i32_0 = arith.constant 0 : i32
    %c0_i32_1 = arith.constant 0 : i32
    return %c0_i32, %c0_i32_0 : i32, i32
  }
  func.func @transform_2(%arg0: i32, %arg1: i32) -> (i32, i32) {
    %c0_i32 = arith.constant 0 : i32
    %c0_i32_0 = arith.constant 0 : i32
    %c0_i32_1 = arith.constant 0 : i32
    return %c0_i32, %c0_i32_0 : i32, i32
  }
  func.func @transform_3(%arg0: i32, %arg1: i32) -> (i32, i32) {
    %c0_i32 = arith.constant 0 : i32
    %c0_i32_0 = arith.constant 0 : i32
    %c0_i32_1 = arith.constant 0 : i32
    return %c0_i32, %c0_i32_0 : i32, i32
  }
  func.func @transform_4(%arg0: i32, %arg1: i32) -> (i32, i32) {
    %c0_i32 = arith.constant 0 : i32
    %c0_i32_0 = arith.constant 0 : i32
    %c0_i32_1 = arith.constant 0 : i32
    return %c0_i32, %c0_i32_0 : i32, i32
  }
  func.func @transform_5(%arg0: i32, %arg1: i32) -> (i32, i32) {
    %c0_i32 = arith.constant 0 : i32
    %c0_i32_0 = arith.constant 0 : i32
    %c0_i32_1 = arith.constant 0 : i32
    return %c0_i32, %c0_i32_0 : i32, i32
  }
  func.func @transform_6(%arg0: i32, %arg1: i32) -> (i32, i32) {
    %c0_i32 = arith.constant 0 : i32
    %c0_i32_0 = arith.constant 0 : i32
    %c0_i32_1 = arith.constant 0 : i32
    return %c0_i32, %c0_i32_0 : i32, i32
  }
  func.func @transform_7(%arg0: i32, %arg1: i32) -> (i32, i32) {
    %c0_i32 = arith.constant 0 : i32
    %c0_i32_0 = arith.constant 0 : i32
    %c0_i32_1 = arith.constant 0 : i32
    return %c0_i32, %c0_i32_0 : i32, i32
  }
  func.func @transform_8(%arg0: i32, %arg1: i32) -> (i32, i32) {
    %c0_i32 = arith.constant 0 : i32
    %c0_i32_0 = arith.constant 0 : i32
    %c0_i32_1 = arith.constant 0 : i32
    return %c0_i32, %c0_i32_0 : i32, i32
  }
  func.func @transform_9(%arg0: i32, %arg1: i32) -> (i32, i32) {
    %c0_i32 = arith.constant 0 : i32
    %c0_i32_0 = arith.constant 0 : i32
    %c0_i32_1 = arith.constant 0 : i32
    return %c0_i32, %c0_i32_0 : i32, i32
  }
  func.func @transform_10(%arg0: i32, %arg1: i32) -> (i32, i32) {
    %c0_i32 = arith.constant 0 : i32
    %c0_i32_0 = arith.constant 0 : i32
    %c0_i32_1 = arith.constant 0 : i32
    return %c0_i32, %c0_i32_0 : i32, i32
  }
  func.func @transform_11(%arg0: i32, %arg1: i32) -> (i32, i32) {
    %c0_i32 = arith.constant 0 : i32
    %c0_i32_0 = arith.constant 0 : i32
    %c0_i32_1 = arith.constant 0 : i32
    return %c0_i32, %c0_i32_0 : i32, i32
  }
  func.func @transform_12(%arg0: i32, %arg1: i32) -> (i32, i32) {
    %c0_i32 = arith.constant 0 : i32
    %c0_i32_0 = arith.constant 0 : i32
    %c0_i32_1 = arith.constant 0 : i32
    return %c0_i32, %c0_i32_0 : i32, i32
  }
  func.func @transform_13(%arg0: i32, %arg1: i32) -> (i32, i32) {
    %c0_i32 = arith.constant 0 : i32
    %c0_i32_0 = arith.constant 0 : i32
    %c0_i32_1 = arith.constant 0 : i32
    return %c0_i32, %c0_i32_0 : i32, i32
  }
  func.func @transform_14(%arg0: i32, %arg1: i32) -> (i32, i32) {
    %c0_i32 = arith.constant 0 : i32
    %c0_i32_0 = arith.constant 0 : i32
    %c0_i32_1 = arith.constant 0 : i32
    return %c0_i32, %c0_i32_0 : i32, i32
  }
  func.func @transform_15(%arg0: i32, %arg1: i32) -> (i32, i32) {
    %c0_i32 = arith.constant 0 : i32
    %c0_i32_0 = arith.constant 0 : i32
    %c0_i32_1 = arith.constant 0 : i32
    return %c0_i32, %c0_i32_0 : i32, i32
  }
  func.func @transform_16(%arg0: i32, %arg1: i32) -> (i32, i32) {
    %c0_i32 = arith.constant 0 : i32
    %c0_i32_0 = arith.constant 0 : i32
    %c0_i32_1 = arith.constant 0 : i32
    return %c0_i32, %c0_i32_0 : i32, i32
  }
  func.func @transform_17(%arg0: i32, %arg1: i32) -> (i32, i32, i32) {
    %c0_i32 = arith.constant 0 : i32
    %c0_i32_0 = arith.constant 0 : i32
    return %arg0, %arg1, %c0_i32 : i32, i32, i32
  }
}

</mosaic_0001>

<llo_original>
// kernel: tpu_custom_call.1
$region0: #{tpu_custom_call.1}
  #allocation0 [shape = 'u32[]', space=smem, size = 0x4, offset = 0x4, fixed_abs, tag = 'smem constant byte address 0x4 - core index']
  #allocation1 [shape = 'u32[144,128]{1,0:T(1,128)}', space=vmem, size = 0x12000, scoped, tag = 'internal scratch']
  %s0 = inlined_call_operand.hbm [shape: f32[2,8,128], index: 0, kind: input, shape index: {}]
  %s1 = inlined_call_operand.hbm [shape: bf16[128,128], index: 1, kind: input, shape index: {}]
  %s2 = inlined_call_operand.vmem [shape: f32[1,128], index: 2, kind: input, shape index: {}]
  %s3 = inlined_call_operand.hbm [shape: bf16[128,128], index: 3, kind: input, shape index: {}]
  %s4 = inlined_call_operand.vmem [shape: f32[1,128], index: 4, kind: input, shape index: {}]
  %s5 = inlined_call_operand.hbm [shape: bf16[128,128], index: 5, kind: input, shape index: {}]
  %s6 = inlined_call_operand.vmem [shape: f32[1,128], index: 6, kind: input, shape index: {}]
  %s7 = inlined_call_operand.hbm [shape: bf16[128,128], index: 7, kind: input, shape index: {}]
  %s8 = inlined_call_operand.vmem [shape: f32[1,128], index: 8, kind: input, shape index: {}]
  %s9 = inlined_call_operand.vmem [shape: f32[1,128], index: 9, kind: input, shape index: {}]
  %s10 = inlined_call_operand.vmem [shape: f32[1,128], index: 10, kind: input, shape index: {}]
  %s11 = inlined_call_operand.hbm [shape: bf16[128,256], index: 11, kind: input, shape index: {}]
  %s12 = inlined_call_operand.vmem [shape: f32[1,256], index: 12, kind: input, shape index: {}]
  %s13 = inlined_call_operand.hbm [shape: bf16[256,128], index: 13, kind: input, shape index: {}]
  %s14 = inlined_call_operand.vmem [shape: f32[1,128], index: 14, kind: input, shape index: {}]
  %s15 = inlined_call_operand.vmem [shape: f32[1,128], index: 15, kind: input, shape index: {}]
  %s16 = inlined_call_operand.vmem [shape: f32[1,128], index: 16, kind: input, shape index: {}]
  %s17 = inlined_call_operand.hbm [shape: f32[2,8,128], index: 17, kind: output, shape index: {}]
  %s18 = sld [smem:[#allocation0]]
  $region129: #{tpu_custom_call.1} parent=0
    _
  %s20 = ssub.s32 1, %s18
  %s21 = scalar_select 0, %s20, %s18
  $region1: #{tpu_custom_call.1} parent=0
    #allocation2 [shape = 'u8[8192]{0}', space=vmem, size = 0x2000, scoped, tag = 'input window, operand 0']
    #allocation3 [shape = 's32[2]{0}', space=sflag, size = 0x8, scoped, tag = 'scoped memory for tpu_custom_call.1']
    #allocation4 [shape = 's32[2]{0}', space=sflag, size = 0x8, scoped, tag = 'scoped memory for tpu_custom_call.1']
    #allocation5 [shape = 'u8[32768]{0}', space=vmem, size = 0x8000, scoped, tag = 'input window, operand 1, single buffered']
    #allocation6 [shape = 's32[1]{0}', space=sflag, size = 0x4, scoped, tag = 'scoped memory for tpu_custom_call.1']
    #allocation7 [shape = 'u8[32768]{0}', space=vmem, size = 0x8000, scoped, tag = 'input window, operand 3, single buffered']
    #allocation8 [shape = 'u8[32768]{0}', space=vmem, size = 0x8000, scoped, tag = 'input window, operand 5, single buffered']
    #allocation9 [shape = 's32[1]{0}', space=sflag, size = 0x4, scoped, tag = 'scoped memory for tpu_custom_call.1']
    #allocation10 [shape = 'u8[32768]{0}', space=vmem, size = 0x8000, scoped, tag = 'input window, operand 7, single buffered']
    #allocation11 [shape = 'u8[65536]{0}', space=vmem, size = 0x10000, scoped, tag = 'input window, operand 11, single buffered']
    #allocation12 [shape = 's32[1]{0}', space=sflag, size = 0x4, scoped, tag = 'scoped memory for tpu_custom_call.1']
    #allocation13 [shape = 'u8[65536]{0}', space=vmem, size = 0x10000, scoped, tag = 'input window, operand 13, single buffered']
    #allocation14 [shape = 'u8[8192]{0}', space=vmem, size = 0x2000, scoped, tag = 'output window, operand 0']
    %22 = vsyncpa [#allocation3], 0
    %s23 = scalar_lea.sflag [#allocation3], 1
    %24 = vsyncpa %s23, 0
    %25 = vsyncpa [#allocation6], 0
    %26 = vsyncpa [#allocation9], 0
    %27 = vsyncpa [#allocation12], 0
    %28 = vsyncpa [#allocation4], 0
    %s29 = scalar_lea.sflag [#allocation4], 1
    %30 = vsyncpa %s29, 0
    loop: start=0, step=1, limit=4
    $region2: #{tpu_custom_call.1} parent=1 // loop_pre_header
      _
    $region3: #{tpu_custom_call.1} parent=1 // loop_header
      %s32 = sphi 0, %s36
      %p33 = scmp.ge.s32.totalorder %s32, 4
      %s39 = sphi 0, %s51
      %s40 = sphi 0, %s47
      %s41 = sphi 0, %s39
      %s42 = sphi 0, %s40
      %s43 = sphi 0, %s41
      %s44 = sphi 0, %s42
      %s54 = sphi 0, %s56
      %s57 = sphi 0, %s54
      %s58 = sphi 0, %s57
      %s74 = sphi 0, %s58
      %s78 = sphi 0, %s78
      %s80 = sphi 0, %s78
      %s81 = sphi 0, %s80
      %s95 = sphi 0, %s81
      %s99 = sphi 0, %s99
      %s101 = sphi 0, %s99
      %s102 = sphi 0, %s101
      %s116 = sphi 0, %s102
      %s120 = sphi 0, %s120
      %s122 = sphi 0, %s120
      %s123 = sphi 0, %s122
      %s137 = sphi 0, %s123
      %s141 = sphi 0, %s141
      %s143 = sphi 0, %s141
      %s144 = sphi 0, %s143
      %s158 = sphi 0, %s144
      %s162 = sphi 0, %s162
      %s164 = sphi 0, %s162
      %s165 = sphi 0, %s164
      %s179 = sphi 0, %s165
      %s183 = sphi 0, %s183
      %s185 = sphi 0, %s183
      %s186 = sphi 0, %s185
      %s200 = sphi 0, %s186
      %s204 = sphi 0, %s204
      %s206 = sphi 0, %s204
      %s207 = sphi 0, %s206
      %s221 = sphi 0, %s207
      %s225 = sphi 0, %s225
      %s227 = sphi 0, %s225
      %s228 = sphi 0, %s227
      %s242 = sphi 0, %s228
      %s246 = sphi 0, %s246
      %s248 = sphi 0, %s246
      %s249 = sphi 0, %s248
      %s263 = sphi 0, %s249
      %s267 = sphi 0, %s267
      %s269 = sphi 0, %s267
      %s270 = sphi 0, %s269
      %s284 = sphi 0, %s270
      %s288 = sphi 0, %s288
      %s290 = sphi 0, %s288
      %s291 = sphi 0, %s290
      %s305 = sphi 0, %s291
      %s309 = sphi 0, %s309
      %s311 = sphi 0, %s309
      %s312 = sphi 0, %s311
      %s326 = sphi 0, %s312
      %s330 = sphi 0, %s330
      %s332 = sphi 0, %s330
      %s333 = sphi 0, %s332
      %s347 = sphi 0, %s333
      %s351 = sphi 0, %s351
      %s353 = sphi 0, %s351
      %s354 = sphi 0, %s353
      %s368 = sphi 0, %s354
      %s372 = sphi 0, %s372
      %s374 = sphi 0, %s372
      %s375 = sphi 0, %s374
      %s389 = sphi 0, %s375
      %s393 = sphi 0, %s393
      %s395 = sphi 0, %s393
      %s396 = sphi 0, %s395
      %s410 = sphi 0, %s396
      %s418 = sphi 0, %s420
      %s421 = sphi 0, %s418
      %s422 = sphi 0, %s421
      %s438 = sphi 0, %s422
    $region4: #{tpu_custom_call.1} parent=1 // loop_header_branch
      %35 = sbr.rel (%p33) target = $region8
    $region5: #{tpu_custom_call.1} parent=1 // loop_body
      %s37 = ssub.s32 %s32, 1
      %s38 = ssub.s32 %s32, 2
      %s45 = sadd.s32 1, %s40
      %p46 = scmp.ge.s32.totalorder %s45, 1
      %s47 = scalar_select %p46, 0, %s45
      %s48 = sadd.s32 1, %s39
      %s49 = scalar_select %p46, %s48, %s39
      %p50 = scmp.ge.s32.totalorder %s49, 2
      %s51 = scalar_select %p50, 0, %s49
      %s52 = ssub.s32 %s39, %s51
      %p53 = scmp.eq.s32.totalorder %s52, 0
      %s55 = sadd.s32 %s54, 1
      %s56 = scalar_select %p53, %s54, %s55
      %p59 = pneg %p53
      %p60 = scmp.eq.s32.totalorder %s32, 1
      %p61 = por %p59, %p60
      %p62 = scmp.ne.s32.totalorder %s54, %s57
      %p63 = scmp.eq.s32.totalorder %s32, 0
      %p64 = por %p62, %p63
      %p65 = scmp.ne.s32.totalorder %s54, %s57
      %p66 = scmp.eq.s32.totalorder %s37, 1
      %p67 = por %p65, %p66
      %p68 = scmp.ne.s32.totalorder %s57, %s58
      %p69 = scmp.eq.s32.totalorder %s37, 0
      %p70 = por %p68, %p69
      %p71 = scmp.ne.s32.totalorder %s57, %s58
      %p72 = scmp.eq.s32.totalorder %s38, 1
      %p73 = por %p71, %p72
      %p75 = scmp.ne.s32.totalorder %s58, %s74
      %p76 = scmp.eq.s32.totalorder %s38, 0
      %p77 = por %p75, %p76
      %s79 = sadd.s32 %s78, 1
      %p82 = scmp.eq.s32.totalorder %s32, 1
      %p83 = scmp.ne.s32.totalorder %s78, %s80
      %p84 = scmp.eq.s32.totalorder %s32, 0
      %p85 = por %p83, %p84
      %p86 = scmp.ne.s32.totalorder %s78, %s80
      %p87 = scmp.eq.s32.totalorder %s37, 1
      %p88 = por %p86, %p87
      %p89 = scmp.ne.s32.totalorder %s80, %s81
      %p90 = scmp.eq.s32.totalorder %s37, 0
      %p91 = por %p89, %p90
      %p92 = scmp.ne.s32.totalorder %s80, %s81
      %p93 = scmp.eq.s32.totalorder %s38, 1
      %p94 = por %p92, %p93
      %p96 = scmp.ne.s32.totalorder %s81, %s95
      %p97 = scmp.eq.s32.totalorder %s38, 0
      %p98 = por %p96, %p97
      %s100 = sadd.s32 %s99, 1
      %p103 = scmp.eq.s32.totalorder %s32, 1
      %p104 = scmp.ne.s32.totalorder %s99, %s101
      %p105 = scmp.eq.s32.totalorder %s32, 0
      %p106 = por %p104, %p105
      %p107 = scmp.ne.s32.totalorder %s99, %s101
      %p108 = scmp.eq.s32.totalorder %s37, 1
      %p109 = por %p107, %p108
      %p110 = scmp.ne.s32.totalorder %s101, %s102
      %p111 = scmp.eq.s32.totalorder %s37, 0
      %p112 = por %p110, %p111
      %p113 = scmp.ne.s32.totalorder %s101, %s102
      %p114 = scmp.eq.s32.totalorder %s38, 1
      %p115 = por %p113, %p114
      %p117 = scmp.ne.s32.totalorder %s102, %s116
      %p118 = scmp.eq.s32.totalorder %s38, 0
      %p119 = por %p117, %p118
      %s121 = sadd.s32 %s120, 1
      %p124 = scmp.eq.s32.totalorder %s32, 1
      %p125 = scmp.ne.s32.totalorder %s120, %s122
      %p126 = scmp.eq.s32.totalorder %s32, 0
      %p127 = por %p125, %p126
      %p128 = scmp.ne.s32.totalorder %s120, %s122
      %p129 = scmp.eq.s32.totalorder %s37, 1
      %p130 = por %p128, %p129
      %p131 = scmp.ne.s32.totalorder %s122, %s123
      %p132 = scmp.eq.s32.totalorder %s37, 0
      %p133 = por %p131, %p132
      %p134 = scmp.ne.s32.totalorder %s122, %s123
      %p135 = scmp.eq.s32.totalorder %s38, 1
      %p136 = por %p134, %p135
      %p138 = scmp.ne.s32.totalorder %s123, %s137
      %p139 = scmp.eq.s32.totalorder %s38, 0
      %p140 = por %p138, %p139
      %s142 = sadd.s32 %s141, 1
      %p145 = scmp.eq.s32.totalorder %s32, 1
      %p146 = scmp.ne.s32.totalorder %s141, %s143
      %p147 = scmp.eq.s32.totalorder %s32, 0
      %p148 = por %p146, %p147
      %p149 = scmp.ne.s32.totalorder %s141, %s143
      %p150 = scmp.eq.s32.totalorder %s37, 1
      %p151 = por %p149, %p150
      %p152 = scmp.ne.s32.totalorder %s143, %s144
      %p153 = scmp.eq.s32.totalorder %s37, 0
      %p154 = por %p152, %p153
      %p155 = scmp.ne.s32.totalorder %s143, %s144
      %p156 = scmp.eq.s32.totalorder %s38, 1
      %p157 = por %p155, %p156
      %p159 = scmp.ne.s32.totalorder %s144, %s158
      %p160 = scmp.eq.s32.totalorder %s38, 0
      %p161 = por %p159, %p160
      %s163 = sadd.s32 %s162, 1
      %p166 = scmp.eq.s32.totalorder %s32, 1
      %p167 = scmp.ne.s32.totalorder %s162, %s164
      %p168 = scmp.eq.s32.totalorder %s32, 0
      %p169 = por %p167, %p168
      %p170 = scmp.ne.s32.totalorder %s162, %s164
      %p171 = scmp.eq.s32.totalorder %s37, 1
      %p172 = por %p170, %p171
      %p173 = scmp.ne.s32.totalorder %s164, %s165
      %p174 = scmp.eq.s32.totalorder %s37, 0
      %p175 = por %p173, %p174
      %p176 = scmp.ne.s32.totalorder %s164, %s165
      %p177 = scmp.eq.s32.totalorder %s38, 1
      %p178 = por %p176, %p177
      %p180 = scmp.ne.s32.totalorder %s165, %s179
      %p181 = scmp.eq.s32.totalorder %s38, 0
      %p182 = por %p180, %p181
      %s184 = sadd.s32 %s183, 1
      %p187 = scmp.eq.s32.totalorder %s32, 1
      %p188 = scmp.ne.s32.totalorder %s183, %s185
      %p189 = scmp.eq.s32.totalorder %s32, 0
      %p190 = por %p188, %p189
      %p191 = scmp.ne.s32.totalorder %s183, %s185
      %p192 = scmp.eq.s32.totalorder %s37, 1
      %p193 = por %p191, %p192
      %p194 = scmp.ne.s32.totalorder %s185, %s186
      %p195 = scmp.eq.s32.totalorder %s37, 0
      %p196 = por %p194, %p195
      %p197 = scmp.ne.s32.totalorder %s185, %s186
      %p198 = scmp.eq.s32.totalorder %s38, 1
      %p199 = por %p197, %p198
      %p201 = scmp.ne.s32.totalorder %s186, %s200
      %p202 = scmp.eq.s32.totalorder %s38, 0
      %p203 = por %p201, %p202
      %s205 = sadd.s32 %s204, 1
      %p208 = scmp.eq.s32.totalorder %s32, 1
      %p209 = scmp.ne.s32.totalorder %s204, %s206
      %p210 = scmp.eq.s32.totalorder %s32, 0
      %p211 = por %p209, %p210
      %p212 = scmp.ne.s32.totalorder %s204, %s206
      %p213 = scmp.eq.s32.totalorder %s37, 1
      %p214 = por %p212, %p213
      %p215 = scmp.ne.s32.totalorder %s206, %s207
      %p216 = scmp.eq.s32.totalorder %s37, 0
      %p217 = por %p215, %p216
      %p218 = scmp.ne.s32.totalorder %s206, %s207
      %p219 = scmp.eq.s32.totalorder %s38, 1
      %p220 = por %p218, %p219
      %p222 = scmp.ne.s32.totalorder %s207, %s221
      %p223 = scmp.eq.s32.totalorder %s38, 0
      %p224 = por %p222, %p223
      %s226 = sadd.s32 %s225, 1
      %p229 = scmp.eq.s32.totalorder %s32, 1
      %p230 = scmp.ne.s32.totalorder %s225, %s227
      %p231 = scmp.eq.s32.totalorder %s32, 0
      %p232 = por %p230, %p231
      %p233 = scmp.ne.s32.totalorder %s225, %s227
      %p234 = scmp.eq.s32.totalorder %s37, 1
      %p235 = por %p233, %p234
      %p236 = scmp.ne.s32.totalorder %s227, %s228
      %p237 = scmp.eq.s32.totalorder %s37, 0
      %p238 = por %p236, %p237
      %p239 = scmp.ne.s32.totalorder %s227, %s228
      %p240 = scmp.eq.s32.totalorder %s38, 1
      %p241 = por %p239, %p240
      %p243 = scmp.ne.s32.totalorder %s228, %s242
      %p244 = scmp.eq.s32.totalorder %s38, 0
      %p245 = por %p243, %p244
      %s247 = sadd.s32 %s246, 1
      %p250 = scmp.eq.s32.totalorder %s32, 1
      %p251 = scmp.ne.s32.totalorder %s246, %s248
      %p252 = scmp.eq.s32.totalorder %s32, 0
      %p253 = por %p251, %p252
      %p254 = scmp.ne.s32.totalorder %s246, %s248
      %p255 = scmp.eq.s32.totalorder %s37, 1
      %p256 = por %p254, %p255
      %p257 = scmp.ne.s32.totalorder %s248, %s249
      %p258 = scmp.eq.s32.totalorder %s37, 0
      %p259 = por %p257, %p258
      %p260 = scmp.ne.s32.totalorder %s248, %s249
      %p261 = scmp.eq.s32.totalorder %s38, 1
      %p262 = por %p260, %p261
      %p264 = scmp.ne.s32.totalorder %s249, %s263
      %p265 = scmp.eq.s32.totalorder %s38, 0
      %p266 = por %p264, %p265
      %s268 = sadd.s32 %s267, 1
      %p271 = scmp.eq.s32.totalorder %s32, 1
      %p272 = scmp.ne.s32.totalorder %s267, %s269
      %p273 = scmp.eq.s32.totalorder %s32, 0
      %p274 = por %p272, %p273
      %p275 = scmp.ne.s32.totalorder %s267, %s269
      %p276 = scmp.eq.s32.totalorder %s37, 1
      %p277 = por %p275, %p276
      %p278 = scmp.ne.s32.totalorder %s269, %s270
      %p279 = scmp.eq.s32.totalorder %s37, 0
      %p280 = por %p278, %p279
      %p281 = scmp.ne.s32.totalorder %s269, %s270
      %p282 = scmp.eq.s32.totalorder %s38, 1
      %p283 = por %p281, %p282
      %p285 = scmp.ne.s32.totalorder %s270, %s284
      %p286 = scmp.eq.s32.totalorder %s38, 0
      %p287 = por %p285, %p286
      %s289 = sadd.s32 %s288, 1
      %p292 = scmp.eq.s32.totalorder %s32, 1
      %p293 = scmp.ne.s32.totalorder %s288, %s290
      %p294 = scmp.eq.s32.totalorder %s32, 0
      %p295 = por %p293, %p294
      %p296 = scmp.ne.s32.totalorder %s288, %s290
      %p297 = scmp.eq.s32.totalorder %s37, 1
      %p298 = por %p296, %p297
      %p299 = scmp.ne.s32.totalorder %s290, %s291
      %p300 = scmp.eq.s32.totalorder %s37, 0
      %p301 = por %p299, %p300
      %p302 = scmp.ne.s32.totalorder %s290, %s291
      %p303 = scmp.eq.s32.totalorder %s38, 1
      %p304 = por %p302, %p303
      %p306 = scmp.ne.s32.totalorder %s291, %s305
      %p307 = scmp.eq.s32.totalorder %s38, 0
      %p308 = por %p306, %p307
      %s310 = sadd.s32 %s309, 1
      %p313 = scmp.eq.s32.totalorder %s32, 1
      %p314 = scmp.ne.s32.totalorder %s309, %s311
      %p315 = scmp.eq.s32.totalorder %s32, 0
      %p316 = por %p314, %p315
      %p317 = scmp.ne.s32.totalorder %s309, %s311
      %p318 = scmp.eq.s32.totalorder %s37, 1
      %p319 = por %p317, %p318
      %p320 = scmp.ne.s32.totalorder %s311, %s312
      %p321 = scmp.eq.s32.totalorder %s37, 0
      %p322 = por %p320, %p321
      %p323 = scmp.ne.s32.totalorder %s311, %s312
      %p324 = scmp.eq.s32.totalorder %s38, 1
      %p325 = por %p323, %p324
      %p327 = scmp.ne.s32.totalorder %s312, %s326
      %p328 = scmp.eq.s32.totalorder %s38, 0
      %p329 = por %p327, %p328
      %s331 = sadd.s32 %s330, 1
      %p334 = scmp.eq.s32.totalorder %s32, 1
      %p335 = scmp.ne.s32.totalorder %s330, %s332
      %p336 = scmp.eq.s32.totalorder %s32, 0
      %p337 = por %p335, %p336
      %p338 = scmp.ne.s32.totalorder %s330, %s332
      %p339 = scmp.eq.s32.totalorder %s37, 1
      %p340 = por %p338, %p339
      %p341 = scmp.ne.s32.totalorder %s332, %s333
      %p342 = scmp.eq.s32.totalorder %s37, 0
      %p343 = por %p341, %p342
      %p344 = scmp.ne.s32.totalorder %s332, %s333
      %p345 = scmp.eq.s32.totalorder %s38, 1
      %p346 = por %p344, %p345
      %p348 = scmp.ne.s32.totalorder %s333, %s347
      %p349 = scmp.eq.s32.totalorder %s38, 0
      %p350 = por %p348, %p349
      %s352 = sadd.s32 %s351, 1
      %p355 = scmp.eq.s32.totalorder %s32, 1
      %p356 = scmp.ne.s32.totalorder %s351, %s353
      %p357 = scmp.eq.s32.totalorder %s32, 0
      %p358 = por %p356, %p357
      %p359 = scmp.ne.s32.totalorder %s351, %s353
      %p360 = scmp.eq.s32.totalorder %s37, 1
      %p361 = por %p359, %p360
      %p362 = scmp.ne.s32.totalorder %s353, %s354
      %p363 = scmp.eq.s32.totalorder %s37, 0
      %p364 = por %p362, %p363
      %p365 = scmp.ne.s32.totalorder %s353, %s354
      %p366 = scmp.eq.s32.totalorder %s38, 1
      %p367 = por %p365, %p366
      %p369 = scmp.ne.s32.totalorder %s354, %s368
      %p370 = scmp.eq.s32.totalorder %s38, 0
      %p371 = por %p369, %p370
      %s373 = sadd.s32 %s372, 1
      %p376 = scmp.eq.s32.totalorder %s32, 1
      %p377 = scmp.ne.s32.totalorder %s372, %s374
      %p378 = scmp.eq.s32.totalorder %s32, 0
      %p379 = por %p377, %p378
      %p380 = scmp.ne.s32.totalorder %s372, %s374
      %p381 = scmp.eq.s32.totalorder %s37, 1
      %p382 = por %p380, %p381
      %p383 = scmp.ne.s32.totalorder %s374, %s375
      %p384 = scmp.eq.s32.totalorder %s37, 0
      %p385 = por %p383, %p384
      %p386 = scmp.ne.s32.totalorder %s374, %s375
      %p387 = scmp.eq.s32.totalorder %s38, 1
      %p388 = por %p386, %p387
      %p390 = scmp.ne.s32.totalorder %s375, %s389
      %p391 = scmp.eq.s32.totalorder %s38, 0
      %p392 = por %p390, %p391
      %s394 = sadd.s32 %s393, 1
      %p397 = scmp.eq.s32.totalorder %s32, 1
      %p398 = scmp.ne.s32.totalorder %s393, %s395
      %p399 = scmp.eq.s32.totalorder %s32, 0
      %p400 = por %p398, %p399
      %p401 = scmp.ne.s32.totalorder %s393, %s395
      %p402 = scmp.eq.s32.totalorder %s37, 1
      %p403 = por %p401, %p402
      %p404 = scmp.ne.s32.totalorder %s395, %s396
      %p405 = scmp.eq.s32.totalorder %s37, 0
      %p406 = por %p404, %p405
      %p407 = scmp.ne.s32.totalorder %s395, %s396
      %p408 = scmp.eq.s32.totalorder %s38, 1
      %p409 = por %p407, %p408
      %p411 = scmp.ne.s32.totalorder %s396, %s410
      %p412 = scmp.eq.s32.totalorder %s38, 0
      %p413 = por %p411, %p412
      %s414 = ssub.s32 %s39, %s51
      %s415 = ssub.s32 %s40, %s47
      %s416 = sor.u32 %s414, %s415
      %p417 = scmp.eq.s32.totalorder %s416, 0
      %s419 = sadd.s32 %s418, 1
      %s420 = scalar_select %p417, %s418, %s419
      %p423 = pneg %p417
      %p424 = scmp.eq.s32.totalorder %s32, 1
      %p425 = por %p423, %p424
      %p426 = scmp.ne.s32.totalorder %s418, %s421
      %p427 = scmp.eq.s32.totalorder %s32, 0
      %p428 = por %p426, %p427
      %p429 = scmp.ne.s32.totalorder %s418, %s421
      %p430 = scmp.eq.s32.totalorder %s37, 1
      %p431 = por %p429, %p430
      %p432 = scmp.ne.s32.totalorder %s421, %s422
      %p433 = scmp.eq.s32.totalorder %s37, 0
      %p434 = por %p432, %p433
      %p435 = scmp.ne.s32.totalorder %s421, %s422
      %p436 = scmp.eq.s32.totalorder %s38, 1
      %p437 = por %p435, %p436
      %p439 = scmp.ne.s32.totalorder %s422, %s438
      %p440 = scmp.eq.s32.totalorder %s38, 0
      %p441 = por %p439, %p440
      %p442 = scmp.le.s32.totalorder 1, %s32
      %p443 = scmp.lt.s32.totalorder %s32, 3
      %p444 = pnand %p442, %p443
      %p445 = pneg %p444
      // Predicated region
      $region9: #{tpu_custom_call.1} parent=5 // pred_check
        _
      $region10: #{tpu_custom_call.1} parent=5 // pred_check_branch
        %447 = sbr.rel (%p444) target = $region12
      $region11: #{tpu_custom_call.1} parent=5 // pred_region
        %s448 = ssub.s32 %s32, 1
        // Predicated region
        $region13: #{tpu_custom_call.1} parent=11 // pred_check
          %p449 = pneg %p91
        $region14: #{tpu_custom_call.1} parent=11 // pred_check_branch
          %451 = sbr.rel (%p449) target = $region16
        $region15: #{tpu_custom_call.1} parent=11 // pred_region
          %s453 = ssub.s32 1024, 1024
          %454 = vsyncadd [#allocation6], %s453
          %s455 = sshll.u32 [#allocation5], 4
          %s456 = int_to_ptr.vmem [resolvable:$true] %s455
          %461 = dma.hbm_to_vmem [thread:$0]  %s1, 1024, %s456, [#allocation6], 64, 64, 4
        $region16: #{tpu_custom_call.1} parent=11 // pred_fallthru
          _
        // Predicated region
        $region17: #{tpu_custom_call.1} parent=11 // pred_check
          %p462 = pneg %p112
        $region18: #{tpu_custom_call.1} parent=11 // pred_check_branch
          %464 = sbr.rel (%p462) target = $region20
        $region19: #{tpu_custom_call.1} parent=11 // pred_region
          _
        $region20: #{tpu_custom_call.1} parent=11 // pred_fallthru
          _
        // Predicated region
        $region21: #{tpu_custom_call.1} parent=11 // pred_check
          %p465 = pneg %p133
        $region22: #{tpu_custom_call.1} parent=11 // pred_check_branch
          %467 = sbr.rel (%p465) target = $region24
        $region23: #{tpu_custom_call.1} parent=11 // pred_region
          %s469 = ssub.s32 1024, 1024
          %470 = vsyncadd [#allocation6], %s469
          %s471 = sshll.u32 [#allocation7], 4
          %s472 = int_to_ptr.vmem [resolvable:$true] %s471
          %477 = dma.hbm_to_vmem [thread:$0]  %s3, 1024, %s472, [#allocation6], 64, 64, 4
        $region24: #{tpu_custom_call.1} parent=11 // pred_fallthru
          _
        // Predicated region
        $region25: #{tpu_custom_call.1} parent=11 // pred_check
          %p478 = pneg %p154
        $region26: #{tpu_custom_call.1} parent=11 // pred_check_branch
          %480 = sbr.rel (%p478) target = $region28
        $region27: #{tpu_custom_call.1} parent=11 // pred_region
          _
        $region28: #{tpu_custom_call.1} parent=11 // pred_fallthru
          _
        // Predicated region
        $region29: #{tpu_custom_call.1} parent=11 // pred_check
          %p481 = pneg %p175
        $region30: #{tpu_custom_call.1} parent=11 // pred_check_branch
          %483 = sbr.rel (%p481) target = $region32
        $region31: #{tpu_custom_call.1} parent=11 // pred_region
          %s485 = ssub.s32 1024, 1024
          %486 = vsyncadd [#allocation9], %s485
          %s487 = sshll.u32 [#allocation8], 4
          %s488 = int_to_ptr.vmem [resolvable:$true] %s487
          %493 = dma.hbm_to_vmem [thread:$0]  %s5, 1024, %s488, [#allocation9], 64, 64, 4
        $region32: #{tpu_custom_call.1} parent=11 // pred_fallthru
          _
        // Predicated region
        $region33: #{tpu_custom_call.1} parent=11 // pred_check
          %p494 = pneg %p196
        $region34: #{tpu_custom_call.1} parent=11 // pred_check_branch
          %496 = sbr.rel (%p494) target = $region36
        $region35: #{tpu_custom_call.1} parent=11 // pred_region
          _
        $region36: #{tpu_custom_call.1} parent=11 // pred_fallthru
          _
        // Predicated region
        $region37: #{tpu_custom_call.1} parent=11 // pred_check
          %p497 = pneg %p217
        $region38: #{tpu_custom_call.1} parent=11 // pred_check_branch
          %499 = sbr.rel (%p497) target = $region40
        $region39: #{tpu_custom_call.1} parent=11 // pred_region
          %s501 = ssub.s32 1024, 1024
          %502 = vsyncadd [#allocation9], %s501
          %s503 = sshll.u32 [#allocation10], 4
          %s504 = int_to_ptr.vmem [resolvable:$true] %s503
          %509 = dma.hbm_to_vmem [thread:$0]  %s7, 1024, %s504, [#allocation9], 64, 64, 4
        $region40: #{tpu_custom_call.1} parent=11 // pred_fallthru
          _
        // Predicated region
        $region41: #{tpu_custom_call.1} parent=11 // pred_check
          %p510 = pneg %p238
        $region42: #{tpu_custom_call.1} parent=11 // pred_check_branch
          %512 = sbr.rel (%p510) target = $region44
        $region43: #{tpu_custom_call.1} parent=11 // pred_region
          _
        $region44: #{tpu_custom_call.1} parent=11 // pred_fallthru
          _
        // Predicated region
        $region45: #{tpu_custom_call.1} parent=11 // pred_check
          %p513 = pneg %p259
        $region46: #{tpu_custom_call.1} parent=11 // pred_check_branch
          %515 = sbr.rel (%p513) target = $region48
        $region47: #{tpu_custom_call.1} parent=11 // pred_region
          _
        $region48: #{tpu_custom_call.1} parent=11 // pred_fallthru
          _
        // Predicated region
        $region49: #{tpu_custom_call.1} parent=11 // pred_check
          %p516 = pneg %p280
        $region50: #{tpu_custom_call.1} parent=11 // pred_check_branch
          %518 = sbr.rel (%p516) target = $region52
        $region51: #{tpu_custom_call.1} parent=11 // pred_region
          _
        $region52: #{tpu_custom_call.1} parent=11 // pred_fallthru
          _
        // Predicated region
        $region53: #{tpu_custom_call.1} parent=11 // pred_check
          %p519 = pneg %p301
        $region54: #{tpu_custom_call.1} parent=11 // pred_check_branch
          %521 = sbr.rel (%p519) target = $region56
        $region55: #{tpu_custom_call.1} parent=11 // pred_region
          %s523 = ssub.s32 2048, 2048
          %524 = vsyncadd [#allocation12], %s523
          %s525 = sshll.u32 [#allocation11], 4
          %s526 = int_to_ptr.vmem [resolvable:$true] %s525
          %531 = dma.hbm_to_vmem [thread:$0]  %s11, 2048, %s526, [#allocation12], 128, 128, 8
        $region56: #{tpu_custom_call.1} parent=11 // pred_fallthru
          _
        // Predicated region
        $region57: #{tpu_custom_call.1} parent=11 // pred_check
          %p532 = pneg %p322
        $region58: #{tpu_custom_call.1} parent=11 // pred_check_branch
          %534 = sbr.rel (%p532) target = $region60
        $region59: #{tpu_custom_call.1} parent=11 // pred_region
          _
        $region60: #{tpu_custom_call.1} parent=11 // pred_fallthru
          _
        // Predicated region
        $region61: #{tpu_custom_call.1} parent=11 // pred_check
          %p535 = pneg %p343
        $region62: #{tpu_custom_call.1} parent=11 // pred_check_branch
          %537 = sbr.rel (%p535) target = $region64
        $region63: #{tpu_custom_call.1} parent=11 // pred_region
          %s539 = ssub.s32 2048, 2048
          %540 = vsyncadd [#allocation12], %s539
          %s541 = sshll.u32 [#allocation13], 4
          %s542 = int_to_ptr.vmem [resolvable:$true] %s541
          %547 = dma.hbm_to_vmem [thread:$0]  %s13, 2048, %s542, [#allocation12], 64, 64, 4
        $region64: #{tpu_custom_call.1} parent=11 // pred_fallthru
          _
        // Predicated region
        $region65: #{tpu_custom_call.1} parent=11 // pred_check
          %p548 = pneg %p364
        $region66: #{tpu_custom_call.1} parent=11 // pred_check_branch
          %550 = sbr.rel (%p548) target = $region68
        $region67: #{tpu_custom_call.1} parent=11 // pred_region
          _
        $region68: #{tpu_custom_call.1} parent=11 // pred_fallthru
          _
        // Predicated region
        $region69: #{tpu_custom_call.1} parent=11 // pred_check
          %p551 = pneg %p385
        $region70: #{tpu_custom_call.1} parent=11 // pred_check_branch
          %553 = sbr.rel (%p551) target = $region72
        $region71: #{tpu_custom_call.1} parent=11 // pred_region
          _
        $region72: #{tpu_custom_call.1} parent=11 // pred_fallthru
          _
        // Predicated region
        $region73: #{tpu_custom_call.1} parent=11 // pred_check
          %p554 = pneg %p406
        $region74: #{tpu_custom_call.1} parent=11 // pred_check_branch
          %556 = sbr.rel (%p554) target = $region76
        $region75: #{tpu_custom_call.1} parent=11 // pred_region
          _
        $region76: #{tpu_custom_call.1} parent=11 // pred_fallthru
          _
      $region12: #{tpu_custom_call.1} parent=5 // pred_fallthru
        _
      %p557 = scmp.lt.s32.totalorder %s32, 2
      // Predicated region
      $region77: #{tpu_custom_call.1} parent=5 // pred_check
        %p558 = pneg %p557
      $region78: #{tpu_custom_call.1} parent=5 // pred_check_branch
        %560 = sbr.rel (%p558) target = $region80
      $region79: #{tpu_custom_call.1} parent=5 // pred_region
        // Predicated region
        $region81: #{tpu_custom_call.1} parent=79 // pred_check
          %p561 = pneg %p64
        $region82: #{tpu_custom_call.1} parent=79 // pred_check_branch
          %563 = sbr.rel (%p561) target = $region84
        $region83: #{tpu_custom_call.1} parent=79 // pred_region
          %s564 = sand.u32 %s54, 1
          %s565 = scalar_lea.sflag [#allocation3], %s564
          %s566 = sand.u32 %s54, 1
          %s567 = smul.addr %s566, 8
          %s568 = scalar_lea.vmem [#allocation2], %s567
          %s570 = ssub.s32 128, 128
          %571 = vsyncadd %s565, %s570
          %s572 = smul.addr %s39, 128
          %s573 = scalar_lea.hbm %s0, %s572
          %s575 = sshll.u32 %s568, 4
          %s576 = int_to_ptr.vmem [resolvable:$true] %s575
          %578 = dma.hbm_to_vmem [thread:$0]  %s573, 128, %s576, %s565
        $region84: #{tpu_custom_call.1} parent=79 // pred_fallthru
          _
      $region80: #{tpu_custom_call.1} parent=5 // pred_fallthru
        _
      %p579 = scmp.le.s32.totalorder 1, %s32
      %p580 = scmp.lt.s32.totalorder %s32, 3
      %p581 = pnand %p579, %p580
      %p582 = pneg %p581
      // Predicated region
      $region85: #{tpu_custom_call.1} parent=5 // pred_check
        _
      $region86: #{tpu_custom_call.1} parent=5 // pred_check_branch
        %584 = sbr.rel (%p581) target = $region88
      $region87: #{tpu_custom_call.1} parent=5 // pred_region
        %s585 = ssub.s32 %s32, 1
        %s586 = sand.u32 %s57, 1
        %s587 = scalar_lea.sflag [#allocation3], %s586
        %s588 = sand.u32 %s57, 1
        %s589 = smul.addr %s588, 8
        %s590 = scalar_lea.vmem [#allocation2], %s589
        // Predicated region
        $region89: #{tpu_custom_call.1} parent=87 // pred_check
          %p591 = pneg %p70
        $region90: #{tpu_custom_call.1} parent=87 // pred_check_branch
          %593 = sbr.rel (%p591) target = $region92
        $region91: #{tpu_custom_call.1} parent=87 // pred_region
          %594 = dma.done %s587, 128
        $region92: #{tpu_custom_call.1} parent=87 // pred_fallthru
          _
        // Predicated region
        $region93: #{tpu_custom_call.1} parent=87 // pred_check
          %p595 = pneg %p91
        $region94: #{tpu_custom_call.1} parent=87 // pred_check_branch
          %597 = sbr.rel (%p595) target = $region96
        $region95: #{tpu_custom_call.1} parent=87 // pred_region
          %598 = dma.done [#allocation6], 1024
        $region96: #{tpu_custom_call.1} parent=87 // pred_fallthru
          _
        // Predicated region
        $region97: #{tpu_custom_call.1} parent=87 // pred_check
          %p599 = pneg %p133
        $region98: #{tpu_custom_call.1} parent=87 // pred_check_branch
          %601 = sbr.rel (%p599) target = $region100
        $region99: #{tpu_custom_call.1} parent=87 // pred_region
          %602 = dma.done [#allocation6], 1024
        $region100: #{tpu_custom_call.1} parent=87 // pred_fallthru
          _
        // Predicated region
        $region101: #{tpu_custom_call.1} parent=87 // pred_check
          %p603 = pneg %p175
        $region102: #{tpu_custom_call.1} parent=87 // pred_check_branch
          %605 = sbr.rel (%p603) target = $region104
        $region103: #{tpu_custom_call.1} parent=87 // pred_region
          %606 = dma.done [#allocation9], 1024
        $region104: #{tpu_custom_call.1} parent=87 // pred_fallthru
          _
        // Predicated region
        $region105: #{tpu_custom_call.1} parent=87 // pred_check
          %p607 = pneg %p217
        $region106: #{tpu_custom_call.1} parent=87 // pred_check_branch
          %609 = sbr.rel (%p607) target = $region108
        $region107: #{tpu_custom_call.1} parent=87 // pred_region
          %610 = dma.done [#allocation9], 1024
        $region108: #{tpu_custom_call.1} parent=87 // pred_fallthru
          _
        // Predicated region
        $region109: #{tpu_custom_call.1} parent=87 // pred_check
          %p611 = pneg %p301
        $region110: #{tpu_custom_call.1} parent=87 // pred_check_branch
          %613 = sbr.rel (%p611) target = $region112
        $region111: #{tpu_custom_call.1} parent=87 // pred_region
          %614 = dma.done [#allocation12], 2048
        $region112: #{tpu_custom_call.1} parent=87 // pred_fallthru
          _
        // Predicated region
        $region113: #{tpu_custom_call.1} parent=87 // pred_check
          %p615 = pneg %p343
        $region114: #{tpu_custom_call.1} parent=87 // pred_check_branch
          %617 = sbr.rel (%p615) target = $region116
        $region115: #{tpu_custom_call.1} parent=87 // pred_region
          %618 = dma.done [#allocation12], 2048
        $region116: #{tpu_custom_call.1} parent=87 // pred_fallthru
          _
        %s619 = sand.u32 %s57, 1
        %s620 = scalar_lea.sflag [#allocation3], %s619
        %s621 = sand.u32 %s57, 1
        %s622 = smul.addr %s621, 8
        %s623 = scalar_lea.vmem [#allocation2], %s622
        %p624 = pneg %p70
        %p625 = pneg %p67
        %p626 = pneg %p91
        %p627 = pneg %p88
        %p628 = pneg %p112
        %p629 = pneg %p109
        %p630 = pneg %p133
        %p631 = pneg %p130
        %p632 = pneg %p154
        %p633 = pneg %p151
        %p634 = pneg %p175
        %p635 = pneg %p172
        %p636 = pneg %p196
        %p637 = pneg %p193
        %p638 = pneg %p217
        %p639 = pneg %p214
        %p640 = pneg %p238
        %p641 = pneg %p235
        %p642 = pneg %p259
        %p643 = pneg %p256
        %p644 = pneg %p280
        %p645 = pneg %p277
        %p646 = pneg %p301
        %p647 = pneg %p298
        %p648 = pneg %p322
        %p649 = pneg %p319
        %p650 = pneg %p343
        %p651 = pneg %p340
        %p652 = pneg %p364
        %p653 = pneg %p361
        %p654 = pneg %p385
        %p655 = pneg %p382
        %p656 = pneg %p406
        %p657 = pneg %p403
        %p658 = pneg %p434
        %p659 = pneg %p431
        %s660 = sand.u32 %s421, 1
        %s661 = scalar_lea.sflag [#allocation4], %s660
        %s662 = sand.u32 %s421, 1
        %s663 = smul.addr %s662, 8
        %s664 = scalar_lea.vmem [#allocation14], %s663
        %s666 = smul.u32 %s42, 8
        %s667 = scalar_lea.vmem %s590, %s666 [#allocation2]
        %v668 = vld [vmem:[%s667] sm:$0xff]
        %v669 = vpack.c.bf16 %v668, %v668
        %v670 = vld [vmem:[#allocation5] sm:$0xf]
        %v671 = vld [vmem:[#allocation5 + $0x4] sm:$0xf]
        %v672 = vld [vmem:[#allocation5 + $0x8] sm:$0xf]
        %v673 = vld [vmem:[#allocation5 + $0xc] sm:$0xf]
        %v674 = vld [vmem:[#allocation5 + $0x10] sm:$0xf]
        %v675 = vld [vmem:[#allocation5 + $0x14] sm:$0xf]
        %v676 = vld [vmem:[#allocation5 + $0x18] sm:$0xf]
        %v677 = vld [vmem:[#allocation5 + $0x1c] sm:$0xf]
        %v678 = vld [vmem:[#allocation5 + $0x20] sm:$0xf]
        %v679 = vld [vmem:[#allocation5 + $0x24] sm:$0xf]
        %v680 = vld [vmem:[#allocation5 + $0x28] sm:$0xf]
        %v681 = vld [vmem:[#allocation5 + $0x2c] sm:$0xf]
        %v682 = vld [vmem:[#allocation5 + $0x30] sm:$0xf]
        %v683 = vld [vmem:[#allocation5 + $0x34] sm:$0xf]
        %v684 = vld [vmem:[#allocation5 + $0x38] sm:$0xf]
        %v685 = vld [vmem:[#allocation5 + $0x3c] sm:$0xf]
        %v686 = vld [vmem:[%s2] sm:$0x1]
        %v688 = vlaneseq
        %v689 = vshrl.u32 %v688, 7
        %v690 = vsub.s32 0, %v689
        %v691 = vrot.slane %v686, %v690
        %v709 = vunpack.c.l.b16 %v670
        %v710 = vunpack.c.l.b16 %v671
        %v711 = vunpack.c.l.b16 %v672
        %v712 = vunpack.c.l.b16 %v673
        %v713 = vunpack.c.l.b16 %v674
        %v714 = vunpack.c.l.b16 %v675
        %v715 = vunpack.c.l.b16 %v676
        %v716 = vunpack.c.l.b16 %v677
        %v717 = vunpack.c.l.b16 %v678
        %v718 = vunpack.c.l.b16 %v679
        %v719 = vunpack.c.l.b16 %v680
        %v720 = vunpack.c.l.b16 %v681
        %v721 = vunpack.c.l.b16 %v682
        %v722 = vunpack.c.l.b16 %v683
        %v723 = vunpack.c.l.b16 %v684
        %v724 = vunpack.c.l.b16 %v685
        %v725 = vpack.c.b16 %v710, %v709
        %v726 = vpack.c.b16 %v712, %v711
        %v727 = vpack.c.b16 %v714, %v713
        %v728 = vpack.c.b16 %v716, %v715
        %v729 = vpack.c.b16 %v718, %v717
        %v730 = vpack.c.b16 %v720, %v719
        %v731 = vpack.c.b16 %v722, %v721
        %v732 = vpack.c.b16 %v724, %v723
        %741 = vmatprep.subr.bf16.mxu0 0
        %742 = vmatpush1.bf16.msra.mxu0 %v725
        %743 = vmatprep.subr.bf16.mxu0 0
        %744 = vmatpush1.bf16.msra.mxu0 %v726
        %745 = vmatprep.subr.bf16.mxu0 0
        %746 = vmatpush1.bf16.msra.mxu0 %v727
        %747 = vmatprep.subr.bf16.mxu0 0
        %748 = vmatpush1.bf16.msra.mxu0 %v728
        %749 = vmatprep.subr.bf16.mxu0 0
        %750 = vmatpush1.bf16.msra.mxu0 %v729
        %751 = vmatprep.subr.bf16.mxu0 0
        %752 = vmatpush1.bf16.msra.mxu0 %v730
        %753 = vmatprep.subr.bf16.mxu0 0
        %754 = vmatpush1.bf16.msra.mxu0 %v731
        %755 = vmatprep.subr.bf16.mxu0 0
        %756 = vmatpush1.bf16.msra.mxu0 %v732
        %757 = vmatprep.subr.bf16.mxu0 0
        %758 = vmatpush1.bf16.msra.mxu0 0
        %759 = vmatprep.subr.bf16.mxu0 0
        %760 = vmatpush1.bf16.msra.mxu0 0
        %761 = vmatprep.subr.bf16.mxu0 0
        %762 = vmatpush1.bf16.msra.mxu0 0
        %763 = vmatprep.subr.bf16.mxu0 0
        %764 = vmatpush1.bf16.msra.mxu0 0
        %765 = vmatprep.subr.bf16.mxu0 0
        %766 = vmatpush1.bf16.msra.mxu0 0
        %767 = vmatprep.subr.bf16.mxu0 0
        %768 = vmatpush1.bf16.msra.mxu0 0
        %769 = vmatprep.subr.bf16.mxu0 0
        %770 = vmatpush1.bf16.msra.mxu0 0
        %771 = vmatprep.subr.bf16.mxu0 0
        %772 = vmatpush1.bf16.msra.mxu0 0
        %773 = vmatprep.mubr.bf16.mxu0 0
        %774 = vmatmul.mubr.bf16.gmra.mrb[0].mxu0 %v669
        %v775 = vpop.f32.mrb[0].mxu0
        %v776 = vadd.f32 %v691, %v775
        %v777 = vpop.f32.mrb[0].mxu0
        %v778 = vpop.f32.mrb[0].mxu0
        %v779 = vpop.f32.mrb[0].mxu0
        %780 = vdwg.mxu0
        %v781 = vmul.f32 %v776, 0.17677669
        %783 = vrot.lane.b32.xlu0 %v781, 96
        %v784 = vpop.permute.xlu0 %783
        %786 = vrot.lane.b32.xlu0 %v781, 64
        %v787 = vpop.permute.xlu0 %786
        %789 = vrot.lane.b32.xlu0 %v781, 32
        %v790 = vpop.permute.xlu0 %789
        %v792 = vcombine.low %v781, %v787
        %v793 = vcombine.high %v781, %v787
        %v795 = vunpack.c.l.s4 1983009808
        %v796 = vunpack.c.0.s8 %v795
        %v797 = vlaneseq
        %v798 = vshrl.u32 %v797, 7
        %v799 = vsub.s32 %v796, %v798
        %v800 = vrot.slane %v792, %v799
        %v802 = vunpack.c.l.s4 1983009808
        %v803 = vunpack.c.0.s8 %v802
        %v804 = vlaneseq
        %v805 = vshrl.u32 %v804, 7
        %v806 = vsub.s32 %v803, %v805
        %v807 = vrot.slane %v793, %v806
        %v808 = vcombine.low %v784, %v790
        %v809 = vcombine.high %v784, %v790
        %v811 = vunpack.c.l.s4 1983009808
        %v812 = vunpack.c.0.s8 %v811
        %v813 = vlaneseq
        %v814 = vshrl.u32 %v813, 7
        %v815 = vsub.s32 %v812, %v814
        %v816 = vrot.slane %v808, %v815
        %v818 = vunpack.c.l.s4 1983009808
        %v819 = vunpack.c.0.s8 %v818
        %v820 = vlaneseq
        %v821 = vshrl.u32 %v820, 7
        %v822 = vsub.s32 %v819, %v821
        %v823 = vrot.slane %v809, %v822
        %v824 = vcombine.low %v800, %v816
        %v825 = vcombine.high %v800, %v816
        %v827 = vunpack.c.l.s4 1934713408
        %v828 = vunpack.c.0.s8 %v827
        %v829 = vlaneseq
        %v830 = vshrl.u32 %v829, 7
        %v831 = vsub.s32 %v828, %v830
        %v832 = vrot.slane %v824, %v831
        %v834 = vunpack.c.l.s4 1934713408
        %v835 = vunpack.c.0.s8 %v834
        %v836 = vlaneseq
        %v837 = vshrl.u32 %v836, 7
        %v838 = vsub.s32 %v835, %v837
        %v839 = vrot.slane %v825, %v838
        %v840 = vcombine.low %v807, %v823
        %v841 = vcombine.high %v807, %v823
        %v843 = vunpack.c.l.s4 1934713408
        %v844 = vunpack.c.0.s8 %v843
        %v845 = vlaneseq
        %v846 = vshrl.u32 %v845, 7
        %v847 = vsub.s32 %v844, %v846
        %v848 = vrot.slane %v840, %v847
        %v850 = vunpack.c.l.s4 1934713408
        %v851 = vunpack.c.0.s8 %v850
        %v852 = vlaneseq
        %v853 = vshrl.u32 %v852, 7
        %v854 = vsub.s32 %v851, %v853
        %v855 = vrot.slane %v841, %v854
        %v856 = vcombine.high %v832, 0.0
        %v857 = vcombine.high %v839, 0.0
        %v858 = vcombine.high %v848, 0.0
        %v859 = vcombine.high %v855, 0.0
        %v860 = vcombine.low %v832, %v839
        %v862 = vunpack.c.l.s4 1983009808
        %v863 = vunpack.c.0.s8 %v862
        %v864 = vlaneseq
        %v865 = vshrl.u32 %v864, 7
        %v866 = vsub.s32 %v863, %v865
        %v867 = vrot.slane %v860, %v866
        %v868 = vcombine.low %v856, %v857
        %v870 = vunpack.c.l.s4 1983009808
        %v871 = vunpack.c.0.s8 %v870
        %v872 = vlaneseq
        %v873 = vshrl.u32 %v872, 7
        %v874 = vsub.s32 %v871, %v873
        %v875 = vrot.slane %v868, %v874
        %v876 = vcombine.low %v848, %v855
        %v878 = vunpack.c.l.s4 1983009808
        %v879 = vunpack.c.0.s8 %v878
        %v880 = vlaneseq
        %v881 = vshrl.u32 %v880, 7
        %v882 = vsub.s32 %v879, %v881
        %v883 = vrot.slane %v876, %v882
        %v884 = vcombine.low %v858, %v859
        %v886 = vunpack.c.l.s4 1983009808
        %v887 = vunpack.c.0.s8 %v886
        %v888 = vlaneseq
        %v889 = vshrl.u32 %v888, 7
        %v890 = vsub.s32 %v887, %v889
        %v891 = vrot.slane %v884, %v890
        %v892 = vcombine.low %v867, %v875
        %v893 = vcombine.high %v867, %v875
        %v895 = vunpack.c.l.s4 1934713408
        %v896 = vunpack.c.0.s8 %v895
        %v897 = vlaneseq
        %v898 = vshrl.u32 %v897, 7
        %v899 = vsub.s32 %v896, %v898
        %v900 = vrot.slane %v892, %v899
        %v902 = vunpack.c.l.s4 1934713408
        %v903 = vunpack.c.0.s8 %v902
        %v904 = vlaneseq
        %v905 = vshrl.u32 %v904, 7
        %v906 = vsub.s32 %v903, %v905
        %v907 = vrot.slane %v893, %v906
        %v908 = vcombine.low %v883, %v891
        %v909 = vcombine.high %v883, %v891
        %v911 = vunpack.c.l.s4 1934713408
        %v912 = vunpack.c.0.s8 %v911
        %v913 = vlaneseq
        %v914 = vshrl.u32 %v913, 7
        %v915 = vsub.s32 %v912, %v914
        %v916 = vrot.slane %v908, %v915
        %v918 = vunpack.c.l.s4 1934713408
        %v919 = vunpack.c.0.s8 %v918
        %v920 = vlaneseq
        %v921 = vshrl.u32 %v920, 7
        %v922 = vsub.s32 %v919, %v921
        %v923 = vrot.slane %v909, %v922
        %v924 = vcombine.low %v900, %v916
        %v925 = vcombine.high %v900, %v916
        %v926 = vcombine.low %v907, %v923
        %v927 = vcombine.high %v907, %v923
        %v928 = vpack.c.bf16 %v924, %v924
        %v929 = vpack.c.bf16 %v925, %v925
        %v930 = vpack.c.bf16 %v926, %v926
        %v931 = vpack.c.bf16 %v927, %v927
        %v932 = vld [vmem:[%s590] sm:$0xff]
        %v933 = vpack.c.bf16 %v932, %v932
        %v934 = vld [vmem:[#allocation7] sm:$0xf]
        %v935 = vld [vmem:[#allocation7 + $0x4] sm:$0xf]
        %v936 = vld [vmem:[#allocation7 + $0x8] sm:$0xf]
        %v937 = vld [vmem:[#allocation7 + $0xc] sm:$0xf]
        %v938 = vld [vmem:[#allocation7 + $0x10] sm:$0xf]
        %v939 = vld [vmem:[#allocation7 + $0x14] sm:$0xf]
        %v940 = vld [vmem:[#allocation7 + $0x18] sm:$0xf]
        %v941 = vld [vmem:[#allocation7 + $0x1c] sm:$0xf]
        %v942 = vld [vmem:[#allocation7 + $0x20] sm:$0xf]
        %v943 = vld [vmem:[#allocation7 + $0x24] sm:$0xf]
        %v944 = vld [vmem:[#allocation7 + $0x28] sm:$0xf]
        %v945 = vld [vmem:[#allocation7 + $0x2c] sm:$0xf]
        %v946 = vld [vmem:[#allocation7 + $0x30] sm:$0xf]
        %v947 = vld [vmem:[#allocation7 + $0x34] sm:$0xf]
        %v948 = vld [vmem:[#allocation7 + $0x38] sm:$0xf]
        %v949 = vld [vmem:[#allocation7 + $0x3c] sm:$0xf]
        %v950 = vld [vmem:[%s4] sm:$0x1]
        %v952 = vlaneseq
        %v953 = vshrl.u32 %v952, 7
        %v954 = vsub.s32 0, %v953
        %v955 = vrot.slane %v950, %v954
        %v973 = vunpack.c.l.b16 %v934
        %v974 = vunpack.c.l.b16 %v935
        %v975 = vunpack.c.l.b16 %v936
        %v976 = vunpack.c.l.b16 %v937
        %v977 = vunpack.c.l.b16 %v938
        %v978 = vunpack.c.l.b16 %v939
        %v979 = vunpack.c.l.b16 %v940
        %v980 = vunpack.c.l.b16 %v941
        %v981 = vunpack.c.l.b16 %v942
        %v982 = vunpack.c.l.b16 %v943
        %v983 = vunpack.c.l.b16 %v944
        %v984 = vunpack.c.l.b16 %v945
        %v985 = vunpack.c.l.b16 %v946
        %v986 = vunpack.c.l.b16 %v947
        %v987 = vunpack.c.l.b16 %v948
        %v988 = vunpack.c.l.b16 %v949
        %v989 = vpack.c.b16 %v974, %v973
        %v990 = vpack.c.b16 %v976, %v975
        %v991 = vpack.c.b16 %v978, %v977
        %v992 = vpack.c.b16 %v980, %v979
        %v993 = vpack.c.b16 %v982, %v981
        %v994 = vpack.c.b16 %v984, %v983
        %v995 = vpack.c.b16 %v986, %v985
        %v996 = vpack.c.b16 %v988, %v987
        %1005 = vmatprep.subr.bf16.mxu0 0
        %1006 = vmatpush1.bf16.msra.mxu0 %v989
        %1007 = vmatprep.subr.bf16.mxu0 0
        %1008 = vmatpush1.bf16.msra.mxu0 %v990
        %1009 = vmatprep.subr.bf16.mxu0 0
        %1010 = vmatpush1.bf16.msra.mxu0 %v991
        %1011 = vmatprep.subr.bf16.mxu0 0
        %1012 = vmatpush1.bf16.msra.mxu0 %v992
        %1013 = vmatprep.subr.bf16.mxu0 0
        %1014 = vmatpush1.bf16.msra.mxu0 %v993
        %1015 = vmatprep.subr.bf16.mxu0 0
        %1016 = vmatpush1.bf16.msra.mxu0 %v994
        %1017 = vmatprep.subr.bf16.mxu0 0
        %1018 = vmatpush1.bf16.msra.mxu0 %v995
        %1019 = vmatprep.subr.bf16.mxu0 0
        %1020 = vmatpush1.bf16.msra.mxu0 %v996
        %1021 = vmatprep.subr.bf16.mxu0 0
        %1022 = vmatpush1.bf16.msra.mxu0 0
        %1023 = vmatprep.subr.bf16.mxu0 0
        %1024 = vmatpush1.bf16.msra.mxu0 0
        %1025 = vmatprep.subr.bf16.mxu0 0
        %1026 = vmatpush1.bf16.msra.mxu0 0
        %1027 = vmatprep.subr.bf16.mxu0 0
        %1028 = vmatpush1.bf16.msra.mxu0 0
        %1029 = vmatprep.subr.bf16.mxu0 0
        %1030 = vmatpush1.bf16.msra.mxu0 0
        %1031 = vmatprep.subr.bf16.mxu0 0
        %1032 = vmatpush1.bf16.msra.mxu0 0
        %1033 = vmatprep.subr.bf16.mxu0 0
        %1034 = vmatpush1.bf16.msra.mxu0 0
        %1035 = vmatprep.subr.bf16.mxu0 0
        %1036 = vmatpush1.bf16.msra.mxu0 0
        %1037 = vmatprep.mubr.bf16.mxu0 0
        %1038 = vmatmul.mubr.bf16.gmra.mrb[0].mxu0 %v933
        %v1039 = vpop.f32.mrb[0].mxu0
        %v1040 = vadd.f32 %v955, %v1039
        %v1041 = vpop.f32.mrb[0].mxu0
        %v1042 = vpop.f32.mrb[0].mxu0
        %v1043 = vpop.f32.mrb[0].mxu0
        %1044 = vdwg.mxu0
        %v1045 = vld [vmem:[#allocation8] sm:$0xf]
        %v1046 = vld [vmem:[#allocation8 + $0x4] sm:$0xf]
        %v1047 = vld [vmem:[#allocation8 + $0x8] sm:$0xf]
        %v1048 = vld [vmem:[#allocation8 + $0xc] sm:$0xf]
        %v1049 = vld [vmem:[#allocation8 + $0x10] sm:$0xf]
        %v1050 = vld [vmem:[#allocation8 + $0x14] sm:$0xf]
        %v1051 = vld [vmem:[#allocation8 + $0x18] sm:$0xf]
        %v1052 = vld [vmem:[#allocation8 + $0x1c] sm:$0xf]
        %v1053 = vld [vmem:[#allocation8 + $0x20] sm:$0xf]
        %v1054 = vld [vmem:[#allocation8 + $0x24] sm:$0xf]
        %v1055 = vld [vmem:[#allocation8 + $0x28] sm:$0xf]
        %v1056 = vld [vmem:[#allocation8 + $0x2c] sm:$0xf]
        %v1057 = vld [vmem:[#allocation8 + $0x30] sm:$0xf]
        %v1058 = vld [vmem:[#allocation8 + $0x34] sm:$0xf]
        %v1059 = vld [vmem:[#allocation8 + $0x38] sm:$0xf]
        %v1060 = vld [vmem:[#allocation8 + $0x3c] sm:$0xf]
        %v1061 = vld [vmem:[%s6] sm:$0x1]
        %v1063 = vlaneseq
        %v1064 = vshrl.u32 %v1063, 7
        %v1065 = vsub.s32 0, %v1064
        %v1066 = vrot.slane %v1061, %v1065
        %v1084 = vunpack.c.l.b16 %v1045
        %v1085 = vunpack.c.l.b16 %v1046
        %v1086 = vunpack.c.l.b16 %v1047
        %v1087 = vunpack.c.l.b16 %v1048
        %v1088 = vunpack.c.l.b16 %v1049
        %v1089 = vunpack.c.l.b16 %v1050
        %v1090 = vunpack.c.l.b16 %v1051
        %v1091 = vunpack.c.l.b16 %v1052
        %v1092 = vunpack.c.l.b16 %v1053
        %v1093 = vunpack.c.l.b16 %v1054
        %v1094 = vunpack.c.l.b16 %v1055
        %v1095 = vunpack.c.l.b16 %v1056
        %v1096 = vunpack.c.l.b16 %v1057
        %v1097 = vunpack.c.l.b16 %v1058
        %v1098 = vunpack.c.l.b16 %v1059
        %v1099 = vunpack.c.l.b16 %v1060
        %v1100 = vpack.c.b16 %v1085, %v1084
        %v1101 = vpack.c.b16 %v1087, %v1086
        %v1102 = vpack.c.b16 %v1089, %v1088
        %v1103 = vpack.c.b16 %v1091, %v1090
        %v1104 = vpack.c.b16 %v1093, %v1092
        %v1105 = vpack.c.b16 %v1095, %v1094
        %v1106 = vpack.c.b16 %v1097, %v1096
        %v1107 = vpack.c.b16 %v1099, %v1098
        %1116 = vmatprep.subr.bf16.mxu0 0
        %1117 = vmatpush1.bf16.msra.mxu0 %v1100
        %1118 = vmatprep.subr.bf16.mxu0 0
        %1119 = vmatpush1.bf16.msra.mxu0 %v1101
        %1120 = vmatprep.subr.bf16.mxu0 0
        %1121 = vmatpush1.bf16.msra.mxu0 %v1102
        %1122 = vmatprep.subr.bf16.mxu0 0
        %1123 = vmatpush1.bf16.msra.mxu0 %v1103
        %1124 = vmatprep.subr.bf16.mxu0 0
        %1125 = vmatpush1.bf16.msra.mxu0 %v1104
        %1126 = vmatprep.subr.bf16.mxu0 0
        %1127 = vmatpush1.bf16.msra.mxu0 %v1105
        %1128 = vmatprep.subr.bf16.mxu0 0
        %1129 = vmatpush1.bf16.msra.mxu0 %v1106
        %1130 = vmatprep.subr.bf16.mxu0 0
        %1131 = vmatpush1.bf16.msra.mxu0 %v1107
        %1132 = vmatprep.subr.bf16.mxu0 0
        %1133 = vmatpush1.bf16.msra.mxu0 0
        %1134 = vmatprep.subr.bf16.mxu0 0
        %1135 = vmatpush1.bf16.msra.mxu0 0
        %1136 = vmatprep.subr.bf16.mxu0 0
        %1137 = vmatpush1.bf16.msra.mxu0 0
        %1138 = vmatprep.subr.bf16.mxu0 0
        %1139 = vmatpush1.bf16.msra.mxu0 0
        %1140 = vmatprep.subr.bf16.mxu0 0
        %1141 = vmatpush1.bf16.msra.mxu0 0
        %1142 = vmatprep.subr.bf16.mxu0 0
        %1143 = vmatpush1.bf16.msra.mxu0 0
        %1144 = vmatprep.subr.bf16.mxu0 0
        %1145 = vmatpush1.bf16.msra.mxu0 0
        %1146 = vmatprep.subr.bf16.mxu0 0
        %1147 = vmatpush1.bf16.msra.mxu0 0
        %1148 = vmatprep.mubr.bf16.mxu0 0
        %1149 = vmatmul.mubr.bf16.gmra.mrb[0].mxu0 %v933
        %v1150 = vpop.f32.mrb[0].mxu0
        %v1151 = vadd.f32 %v1066, %v1150
        %v1152 = vpop.f32.mrb[0].mxu0
        %v1153 = vpop.f32.mrb[0].mxu0
        %v1154 = vpop.f32.mrb[0].mxu0
        %1155 = vdwg.mxu0
        %1157 = vrot.lane.b32.xlu0 %v1040, 96
        %v1158 = vpop.permute.xlu0 %1157
        %1160 = vrot.lane.b32.xlu0 %v1040, 64
        %v1161 = vpop.permute.xlu0 %1160
        %1163 = vrot.lane.b32.xlu0 %v1040, 32
        %v1164 = vpop.permute.xlu0 %1163
        %v1166 = vcombine.low %v1040, %v1161
        %v1167 = vcombine.high %v1040, %v1161
        %v1169 = vunpack.c.l.s4 1983009808
        %v1170 = vunpack.c.0.s8 %v1169
        %v1171 = vlaneseq
        %v1172 = vshrl.u32 %v1171, 7
        %v1173 = vsub.s32 %v1170, %v1172
        %v1174 = vrot.slane %v1166, %v1173
        %v1176 = vunpack.c.l.s4 1983009808
        %v1177 = vunpack.c.0.s8 %v1176
        %v1178 = vlaneseq
        %v1179 = vshrl.u32 %v1178, 7
        %v1180 = vsub.s32 %v1177, %v1179
        %v1181 = vrot.slane %v1167, %v1180
        %v1182 = vcombine.low %v1158, %v1164
        %v1183 = vcombine.high %v1158, %v1164
        %v1185 = vunpack.c.l.s4 1983009808
        %v1186 = vunpack.c.0.s8 %v1185
        %v1187 = vlaneseq
        %v1188 = vshrl.u32 %v1187, 7
        %v1189 = vsub.s32 %v1186, %v1188
        %v1190 = vrot.slane %v1182, %v1189
        %v1192 = vunpack.c.l.s4 1983009808
        %v1193 = vunpack.c.0.s8 %v1192
        %v1194 = vlaneseq
        %v1195 = vshrl.u32 %v1194, 7
        %v1196 = vsub.s32 %v1193, %v1195
        %v1197 = vrot.slane %v1183, %v1196
        %v1198 = vcombine.low %v1174, %v1190
        %v1199 = vcombine.high %v1174, %v1190
        %v1201 = vunpack.c.l.s4 1934713408
        %v1202 = vunpack.c.0.s8 %v1201
        %v1203 = vlaneseq
        %v1204 = vshrl.u32 %v1203, 7
        %v1205 = vsub.s32 %v1202, %v1204
        %v1206 = vrot.slane %v1198, %v1205
        %v1208 = vunpack.c.l.s4 1934713408
        %v1209 = vunpack.c.0.s8 %v1208
        %v1210 = vlaneseq
        %v1211 = vshrl.u32 %v1210, 7
        %v1212 = vsub.s32 %v1209, %v1211
        %v1213 = vrot.slane %v1199, %v1212
        %v1214 = vcombine.low %v1181, %v1197
        %v1215 = vcombine.high %v1181, %v1197
        %v1217 = vunpack.c.l.s4 1934713408
        %v1218 = vunpack.c.0.s8 %v1217
        %v1219 = vlaneseq
        %v1220 = vshrl.u32 %v1219, 7
        %v1221 = vsub.s32 %v1218, %v1220
        %v1222 = vrot.slane %v1214, %v1221
        %v1224 = vunpack.c.l.s4 1934713408
        %v1225 = vunpack.c.0.s8 %v1224
        %v1226 = vlaneseq
        %v1227 = vshrl.u32 %v1226, 7
        %v1228 = vsub.s32 %v1225, %v1227
        %v1229 = vrot.slane %v1215, %v1228
        %v1230 = vcombine.high %v1206, 0.0
        %v1231 = vcombine.high %v1213, 0.0
        %v1232 = vcombine.high %v1222, 0.0
        %v1233 = vcombine.high %v1229, 0.0
        %v1234 = vcombine.low %v1206, %v1213
        %v1236 = vunpack.c.l.s4 1983009808
        %v1237 = vunpack.c.0.s8 %v1236
        %v1238 = vlaneseq
        %v1239 = vshrl.u32 %v1238, 7
        %v1240 = vsub.s32 %v1237, %v1239
        %v1241 = vrot.slane %v1234, %v1240
        %v1242 = vcombine.low %v1230, %v1231
        %v1244 = vunpack.c.l.s4 1983009808
        %v1245 = vunpack.c.0.s8 %v1244
        %v1246 = vlaneseq
        %v1247 = vshrl.u32 %v1246, 7
        %v1248 = vsub.s32 %v1245, %v1247
        %v1249 = vrot.slane %v1242, %v1248
        %v1250 = vcombine.low %v1222, %v1229
        %v1252 = vunpack.c.l.s4 1983009808
        %v1253 = vunpack.c.0.s8 %v1252
        %v1254 = vlaneseq
        %v1255 = vshrl.u32 %v1254, 7
        %v1256 = vsub.s32 %v1253, %v1255
        %v1257 = vrot.slane %v1250, %v1256
        %v1258 = vcombine.low %v1232, %v1233
        %v1260 = vunpack.c.l.s4 1983009808
        %v1261 = vunpack.c.0.s8 %v1260
        %v1262 = vlaneseq
        %v1263 = vshrl.u32 %v1262, 7
        %v1264 = vsub.s32 %v1261, %v1263
        %v1265 = vrot.slane %v1258, %v1264
        %v1266 = vcombine.low %v1241, %v1249
        %v1267 = vcombine.high %v1241, %v1249
        %v1269 = vunpack.c.l.s4 1934713408
        %v1270 = vunpack.c.0.s8 %v1269
        %v1271 = vlaneseq
        %v1272 = vshrl.u32 %v1271, 7
        %v1273 = vsub.s32 %v1270, %v1272
        %v1274 = vrot.slane %v1266, %v1273
        %v1276 = vunpack.c.l.s4 1934713408
        %v1277 = vunpack.c.0.s8 %v1276
        %v1278 = vlaneseq
        %v1279 = vshrl.u32 %v1278, 7
        %v1280 = vsub.s32 %v1277, %v1279
        %v1281 = vrot.slane %v1267, %v1280
        %v1282 = vcombine.low %v1257, %v1265
        %v1283 = vcombine.high %v1257, %v1265
        %v1285 = vunpack.c.l.s4 1934713408
        %v1286 = vunpack.c.0.s8 %v1285
        %v1287 = vlaneseq
        %v1288 = vshrl.u32 %v1287, 7
        %v1289 = vsub.s32 %v1286, %v1288
        %v1290 = vrot.slane %v1282, %v1289
        %v1292 = vunpack.c.l.s4 1934713408
        %v1293 = vunpack.c.0.s8 %v1292
        %v1294 = vlaneseq
        %v1295 = vshrl.u32 %v1294, 7
        %v1296 = vsub.s32 %v1293, %v1295
        %v1297 = vrot.slane %v1283, %v1296
        %v1298 = vcombine.low %v1274, %v1290
        %v1299 = vcombine.high %v1274, %v1290
        %v1300 = vcombine.low %v1281, %v1297
        %v1301 = vcombine.high %v1281, %v1297
        %v1302 = vpack.c.bf16 %v1298, %v1298
        %v1303 = vpack.c.bf16 %v1299, %v1299
        %v1304 = vpack.c.bf16 %v1300, %v1300
        %v1305 = vpack.c.bf16 %v1301, %v1301
        %1307 = vrot.lane.b32.xlu0 %v1151, 96
        %v1308 = vpop.permute.xlu0 %1307
        %1310 = vrot.lane.b32.xlu0 %v1151, 64
        %v1311 = vpop.permute.xlu0 %1310
        %1313 = vrot.lane.b32.xlu0 %v1151, 32
        %v1314 = vpop.permute.xlu0 %1313
        %v1316 = vcombine.low %v1151, %v1311
        %v1317 = vcombine.high %v1151, %v1311
        %v1319 = vunpack.c.l.s4 1983009808
        %v1320 = vunpack.c.0.s8 %v1319
        %v1321 = vlaneseq
        %v1322 = vshrl.u32 %v1321, 7
        %v1323 = vsub.s32 %v1320, %v1322
        %v1324 = vrot.slane %v1316, %v1323
        %v1326 = vunpack.c.l.s4 1983009808
        %v1327 = vunpack.c.0.s8 %v1326
        %v1328 = vlaneseq
        %v1329 = vshrl.u32 %v1328, 7
        %v1330 = vsub.s32 %v1327, %v1329
        %v1331 = vrot.slane %v1317, %v1330
        %v1332 = vcombine.low %v1308, %v1314
        %v1333 = vcombine.high %v1308, %v1314
        %v1335 = vunpack.c.l.s4 1983009808
        %v1336 = vunpack.c.0.s8 %v1335
        %v1337 = vlaneseq
        %v1338 = vshrl.u32 %v1337, 7
        %v1339 = vsub.s32 %v1336, %v1338
        %v1340 = vrot.slane %v1332, %v1339
        %v1342 = vunpack.c.l.s4 1983009808
        %v1343 = vunpack.c.0.s8 %v1342
        %v1344 = vlaneseq
        %v1345 = vshrl.u32 %v1344, 7
        %v1346 = vsub.s32 %v1343, %v1345
        %v1347 = vrot.slane %v1333, %v1346
        %v1348 = vcombine.low %v1324, %v1340
        %v1349 = vcombine.high %v1324, %v1340
        %v1351 = vunpack.c.l.s4 1934713408
        %v1352 = vunpack.c.0.s8 %v1351
        %v1353 = vlaneseq
        %v1354 = vshrl.u32 %v1353, 7
        %v1355 = vsub.s32 %v1352, %v1354
        %v1356 = vrot.slane %v1348, %v1355
        %v1358 = vunpack.c.l.s4 1934713408
        %v1359 = vunpack.c.0.s8 %v1358
        %v1360 = vlaneseq
        %v1361 = vshrl.u32 %v1360, 7
        %v1362 = vsub.s32 %v1359, %v1361
        %v1363 = vrot.slane %v1349, %v1362
        %v1364 = vcombine.low %v1331, %v1347
        %v1365 = vcombine.high %v1331, %v1347
        %v1367 = vunpack.c.l.s4 1934713408
        %v1368 = vunpack.c.0.s8 %v1367
        %v1369 = vlaneseq
        %v1370 = vshrl.u32 %v1369, 7
        %v1371 = vsub.s32 %v1368, %v1370
        %v1372 = vrot.slane %v1364, %v1371
        %v1374 = vunpack.c.l.s4 1934713408
        %v1375 = vunpack.c.0.s8 %v1374
        %v1376 = vlaneseq
        %v1377 = vshrl.u32 %v1376, 7
        %v1378 = vsub.s32 %v1375, %v1377
        %v1379 = vrot.slane %v1365, %v1378
        %v1380 = vcombine.high %v1356, 0.0
        %v1381 = vcombine.high %v1363, 0.0
        %v1382 = vcombine.high %v1372, 0.0
        %v1383 = vcombine.high %v1379, 0.0
        %v1384 = vcombine.low %v1356, %v1363
        %v1386 = vunpack.c.l.s4 1983009808
        %v1387 = vunpack.c.0.s8 %v1386
        %v1388 = vlaneseq
        %v1389 = vshrl.u32 %v1388, 7
        %v1390 = vsub.s32 %v1387, %v1389
        %v1391 = vrot.slane %v1384, %v1390
        %v1392 = vcombine.low %v1380, %v1381
        %v1394 = vunpack.c.l.s4 1983009808
        %v1395 = vunpack.c.0.s8 %v1394
        %v1396 = vlaneseq
        %v1397 = vshrl.u32 %v1396, 7
        %v1398 = vsub.s32 %v1395, %v1397
        %v1399 = vrot.slane %v1392, %v1398
        %v1400 = vcombine.low %v1372, %v1379
        %v1402 = vunpack.c.l.s4 1983009808
        %v1403 = vunpack.c.0.s8 %v1402
        %v1404 = vlaneseq
        %v1405 = vshrl.u32 %v1404, 7
        %v1406 = vsub.s32 %v1403, %v1405
        %v1407 = vrot.slane %v1400, %v1406
        %v1408 = vcombine.low %v1382, %v1383
        %v1410 = vunpack.c.l.s4 1983009808
        %v1411 = vunpack.c.0.s8 %v1410
        %v1412 = vlaneseq
        %v1413 = vshrl.u32 %v1412, 7
        %v1414 = vsub.s32 %v1411, %v1413
        %v1415 = vrot.slane %v1408, %v1414
        %v1416 = vcombine.low %v1391, %v1399
        %v1417 = vcombine.high %v1391, %v1399
        %v1419 = vunpack.c.l.s4 1934713408
        %v1420 = vunpack.c.0.s8 %v1419
        %v1421 = vlaneseq
        %v1422 = vshrl.u32 %v1421, 7
        %v1423 = vsub.s32 %v1420, %v1422
        %v1424 = vrot.slane %v1416, %v1423
        %v1426 = vunpack.c.l.s4 1934713408
        %v1427 = vunpack.c.0.s8 %v1426
        %v1428 = vlaneseq
        %v1429 = vshrl.u32 %v1428, 7
        %v1430 = vsub.s32 %v1427, %v1429
        %v1431 = vrot.slane %v1417, %v1430
        %v1432 = vcombine.low %v1407, %v1415
        %v1433 = vcombine.high %v1407, %v1415
        %v1435 = vunpack.c.l.s4 1934713408
        %v1436 = vunpack.c.0.s8 %v1435
        %v1437 = vlaneseq
        %v1438 = vshrl.u32 %v1437, 7
        %v1439 = vsub.s32 %v1436, %v1438
        %v1440 = vrot.slane %v1432, %v1439
        %v1442 = vunpack.c.l.s4 1934713408
        %v1443 = vunpack.c.0.s8 %v1442
        %v1444 = vlaneseq
        %v1445 = vshrl.u32 %v1444, 7
        %v1446 = vsub.s32 %v1443, %v1445
        %v1447 = vrot.slane %v1433, %v1446
        %v1448 = vcombine.low %v1424, %v1440
        %v1449 = vcombine.high %v1424, %v1440
        %v1450 = vcombine.low %v1431, %v1447
        %v1451 = vcombine.high %v1431, %v1447
        %v1452 = vpack.c.bf16 %v1448, %v1448
        %v1453 = vpack.c.bf16 %v1449, %v1449
        %v1454 = vpack.c.bf16 %v1450, %v1450
        %v1455 = vpack.c.bf16 %v1451, %v1451
        %vm1456 = vcmask 261120
        %v1458 = vsel %vm1456, %v928, 0
        %v1461 = vsel %vm1456, %v1302, 0
        %1463 = vmatprep.subr.bf16.mxu0 0
        %1464 = vmatpush1.bf16.xpose.msra.mxu0 %v1461
        %1465 = vmatprep.subr.bf16.mxu0 0
        %1466 = vmatpush1.bf16.xpose.msra.mxu0 0
        %1467 = vmatprep.subr.bf16.mxu0 0
        %1468 = vmatpush1.bf16.xpose.msra.mxu0 0
        %1469 = vmatprep.subr.bf16.mxu0 0
        %1470 = vmatpush1.bf16.xpose.msra.mxu0 0
        %1471 = vmatprep.subr.bf16.mxu0 0
        %1472 = vmatpush1.bf16.xpose.msra.mxu0 0
        %1473 = vmatprep.subr.bf16.mxu0 0
        %1474 = vmatpush1.bf16.xpose.msra.mxu0 0
        %1475 = vmatprep.subr.bf16.mxu0 0
        %1476 = vmatpush1.bf16.xpose.msra.mxu0 0
        %1477 = vmatprep.subr.bf16.mxu0 0
        %1478 = vmatpush1.bf16.xpose.msra.mxu0 0
        %1479 = vmatprep.subr.bf16.mxu0 0
        %1480 = vmatpush1.bf16.xpose.msra.mxu0 0
        %1481 = vmatprep.subr.bf16.mxu0 0
        %1482 = vmatpush1.bf16.xpose.msra.mxu0 0
        %1483 = vmatprep.subr.bf16.mxu0 0
        %1484 = vmatpush1.bf16.xpose.msra.mxu0 0
        %1485 = vmatprep.subr.bf16.mxu0 0
        %1486 = vmatpush1.bf16.xpose.msra.mxu0 0
        %1487 = vmatprep.subr.bf16.mxu0 0
        %1488 = vmatpush1.bf16.xpose.msra.mxu0 0
        %1489 = vmatprep.subr.bf16.mxu0 0
        %1490 = vmatpush1.bf16.xpose.msra.mxu0 0
        %1491 = vmatprep.subr.bf16.mxu0 0
        %1492 = vmatpush1.bf16.xpose.msra.mxu0 0
        %1493 = vmatprep.subr.bf16.mxu0 0
        %1494 = vmatpush1.bf16.xpose.msra.mxu0 0
        %1495 = vmatprep.mubr.bf16.mxu0 0
        %1496 = vmatmul.mubr.bf16.gmra.mrb[0].mxu0 %v1458
        %v1497 = vpop.f32.mrb[0].mxu0
        %v1498 = vadd.f32 0.0, %v1497
        %v1499 = vpop.f32.mrb[0].mxu0
        %v1500 = vpop.f32.mrb[0].mxu0
        %v1501 = vpop.f32.mrb[0].mxu0
        %1502 = vdwg.mxu0
        %v1504 = vsel %vm1456, %v929, 0
        %v1507 = vsel %vm1456, %v1303, 0
        %1509 = vmatprep.subr.bf16.mxu0 0
        %1510 = vmatpush1.bf16.xpose.msra.mxu0 %v1507
        %1511 = vmatprep.subr.bf16.mxu0 0
        %1512 = vmatpush1.bf16.xpose.msra.mxu0 0
        %1513 = vmatprep.subr.bf16.mxu0 0
        %1514 = vmatpush1.bf16.xpose.msra.mxu0 0
        %1515 = vmatprep.subr.bf16.mxu0 0
        %1516 = vmatpush1.bf16.xpose.msra.mxu0 0
        %1517 = vmatprep.subr.bf16.mxu0 0
        %1518 = vmatpush1.bf16.xpose.msra.mxu0 0
        %1519 = vmatprep.subr.bf16.mxu0 0
        %1520 = vmatpush1.bf16.xpose.msra.mxu0 0
        %1521 = vmatprep.subr.bf16.mxu0 0
        %1522 = vmatpush1.bf16.xpose.msra.mxu0 0
        %1523 = vmatprep.subr.bf16.mxu0 0
        %1524 = vmatpush1.bf16.xpose.msra.mxu0 0
        %1525 = vmatprep.subr.bf16.mxu0 0
        %1526 = vmatpush1.bf16.xpose.msra.mxu0 0
        %1527 = vmatprep.subr.bf16.mxu0 0
        %1528 = vmatpush1.bf16.xpose.msra.mxu0 0
        %1529 = vmatprep.subr.bf16.mxu0 0
        %1530 = vmatpush1.bf16.xpose.msra.mxu0 0
        %1531 = vmatprep.subr.bf16.mxu0 0
        %1532 = vmatpush1.bf16.xpose.msra.mxu0 0
        %1533 = vmatprep.subr.bf16.mxu0 0
        %1534 = vmatpush1.bf16.xpose.msra.mxu0 0
        %1535 = vmatprep.subr.bf16.mxu0 0
        %1536 = vmatpush1.bf16.xpose.msra.mxu0 0
        %1537 = vmatprep.subr.bf16.mxu0 0
        %1538 = vmatpush1.bf16.xpose.msra.mxu0 0
        %1539 = vmatprep.subr.bf16.mxu0 0
        %1540 = vmatpush1.bf16.xpose.msra.mxu0 0
        %1541 = vmatprep.mubr.bf16.mxu0 0
        %1542 = vmatmul.mubr.bf16.gmra.mrb[0].mxu0 %v1504
        %v1543 = vpop.f32.mrb[0].mxu0
        %v1544 = vadd.f32 0.0, %v1543
        %v1545 = vpop.f32.mrb[0].mxu0
        %v1546 = vpop.f32.mrb[0].mxu0
        %v1547 = vpop.f32.mrb[0].mxu0
        %1548 = vdwg.mxu0
        %v1550 = vsel %vm1456, %v930, 0
        %v1553 = vsel %vm1456, %v1304, 0
        %1555 = vmatprep.subr.bf16.mxu0 0
        %1556 = vmatpush1.bf16.xpose.msra.mxu0 %v1553
        %1557 = vmatprep.subr.bf16.mxu0 0
        %1558 = vmatpush1.bf16.xpose.msra.mxu0 0
        %1559 = vmatprep.subr.bf16.mxu0 0
        %1560 = vmatpush1.bf16.xpose.msra.mxu0 0
        %1561 = vmatprep.subr.bf16.mxu0 0
        %1562 = vmatpush1.bf16.xpose.msra.mxu0 0
        %1563 = vmatprep.subr.bf16.mxu0 0
        %1564 = vmatpush1.bf16.xpose.msra.mxu0 0
        %1565 = vmatprep.subr.bf16.mxu0 0
        %1566 = vmatpush1.bf16.xpose.msra.mxu0 0
        %1567 = vmatprep.subr.bf16.mxu0 0
        %1568 = vmatpush1.bf16.xpose.msra.mxu0 0
        %1569 = vmatprep.subr.bf16.mxu0 0
        %1570 = vmatpush1.bf16.xpose.msra.mxu0 0
        %1571 = vmatprep.subr.bf16.mxu0 0
        %1572 = vmatpush1.bf16.xpose.msra.mxu0 0
        %1573 = vmatprep.subr.bf16.mxu0 0
        %1574 = vmatpush1.bf16.xpose.msra.mxu0 0
        %1575 = vmatprep.subr.bf16.mxu0 0
        %1576 = vmatpush1.bf16.xpose.msra.mxu0 0
        %1577 = vmatprep.subr.bf16.mxu0 0
        %1578 = vmatpush1.bf16.xpose.msra.mxu0 0
        %1579 = vmatprep.subr.bf16.mxu0 0
        %1580 = vmatpush1.bf16.xpose.msra.mxu0 0
        %1581 = vmatprep.subr.bf16.mxu0 0
        %1582 = vmatpush1.bf16.xpose.msra.mxu0 0
        %1583 = vmatprep.subr.bf16.mxu0 0
        %1584 = vmatpush1.bf16.xpose.msra.mxu0 0
        %1585 = vmatprep.subr.bf16.mxu0 0
        %1586 = vmatpush1.bf16.xpose.msra.mxu0 0
        %1587 = vmatprep.mubr.bf16.mxu0 0
        %1588 = vmatmul.mubr.bf16.gmra.mrb[0].mxu0 %v1550
        %v1589 = vpop.f32.mrb[0].mxu0
        %v1590 = vadd.f32 0.0, %v1589
        %v1591 = vpop.f32.mrb[0].mxu0
        %v1592 = vpop.f32.mrb[0].mxu0
        %v1593 = vpop.f32.mrb[0].mxu0
        %1594 = vdwg.mxu0
        %v1596 = vsel %vm1456, %v931, 0
        %v1599 = vsel %vm1456, %v1305, 0
        %1601 = vmatprep.subr.bf16.mxu0 0
        %1602 = vmatpush1.bf16.xpose.msra.mxu0 %v1599
        %1603 = vmatprep.subr.bf16.mxu0 0
        %1604 = vmatpush1.bf16.xpose.msra.mxu0 0
        %1605 = vmatprep.subr.bf16.mxu0 0
        %1606 = vmatpush1.bf16.xpose.msra.mxu0 0
        %1607 = vmatprep.subr.bf16.mxu0 0
        %1608 = vmatpush1.bf16.xpose.msra.mxu0 0
        %1609 = vmatprep.subr.bf16.mxu0 0
        %1610 = vmatpush1.bf16.xpose.msra.mxu0 0
        %1611 = vmatprep.subr.bf16.mxu0 0
        %1612 = vmatpush1.bf16.xpose.msra.mxu0 0
        %1613 = vmatprep.subr.bf16.mxu0 0
        %1614 = vmatpush1.bf16.xpose.msra.mxu0 0
        %1615 = vmatprep.subr.bf16.mxu0 0
        %1616 = vmatpush1.bf16.xpose.msra.mxu0 0
        %1617 = vmatprep.subr.bf16.mxu0 0
        %1618 = vmatpush1.bf16.xpose.msra.mxu0 0
        %1619 = vmatprep.subr.bf16.mxu0 0
        %1620 = vmatpush1.bf16.xpose.msra.mxu0 0
        %1621 = vmatprep.subr.bf16.mxu0 0
        %1622 = vmatpush1.bf16.xpose.msra.mxu0 0
        %1623 = vmatprep.subr.bf16.mxu0 0
        %1624 = vmatpush1.bf16.xpose.msra.mxu0 0
        %1625 = vmatprep.subr.bf16.mxu0 0
        %1626 = vmatpush1.bf16.xpose.msra.mxu0 0
        %1627 = vmatprep.subr.bf16.mxu0 0
        %1628 = vmatpush1.bf16.xpose.msra.mxu0 0
        %1629 = vmatprep.subr.bf16.mxu0 0
        %1630 = vmatpush1.bf16.xpose.msra.mxu0 0
        %1631 = vmatprep.subr.bf16.mxu0 0
        %1632 = vmatpush1.bf16.xpose.msra.mxu0 0
        %1633 = vmatprep.mubr.bf16.mxu0 0
        %1634 = vmatmul.mubr.bf16.gmra.mrb[0].mxu0 %v1596
        %v1635 = vpop.f32.mrb[0].mxu0
        %v1636 = vadd.f32 0.0, %v1635
        %v1637 = vpop.f32.mrb[0].mxu0
        %v1638 = vpop.f32.mrb[0].mxu0
        %v1639 = vpop.f32.mrb[0].mxu0
        %1640 = vdwg.mxu0
        %vm1641 = vcmask 64512
        %v1642 = vsel %vm1641, %v1498, -inf
        %1643 = vmax.xlane.f32.xlu0 %v1642
        %v1644 = vpop.xlane.xlu0 %1643
        %v1645 = vsel %vm1641, %v1544, -inf
        %1646 = vmax.xlane.f32.xlu0 %v1645
        %v1647 = vpop.xlane.xlu0 %1646
        %v1648 = vsel %vm1641, %v1590, -inf
        %1649 = vmax.xlane.f32.xlu0 %v1648
        %v1650 = vpop.xlane.xlu0 %1649
        %v1651 = vsel %vm1641, %v1636, -inf
        %1652 = vmax.xlane.f32.xlu0 %v1651
        %v1653 = vpop.xlane.xlu0 %1652
        %v1654 = vsub.f32 -inf, %v1644
        %v1655 = vsub.f32 -inf, %v1647
        %v1656 = vsub.f32 -inf, %v1650
        %v1657 = vsub.f32 -inf, %v1653
        %v1658 = vmul.f32 %v1654, 1.442695
        %v1659 = vpow.pop %v1658
        %v1660 = vmul.f32 %v1655, 1.442695
        %v1661 = vpow.pop %v1660
        %v1662 = vmul.f32 %v1656, 1.442695
        %v1663 = vpow.pop %v1662
        %v1664 = vmul.f32 %v1657, 1.442695
        %v1665 = vpow.pop %v1664
        %v1666 = vsub.f32 %v1498, %v1644
        %v1667 = vsub.f32 %v1544, %v1647
        %v1668 = vsub.f32 %v1590, %v1650
        %v1669 = vsub.f32 %v1636, %v1653
        %v1670 = vmul.f32 %v1666, 1.442695
        %v1671 = vpow.pop %v1670
        %v1672 = vmul.f32 %v1667, 1.442695
        %v1673 = vpow.pop %v1672
        %v1674 = vmul.f32 %v1668, 1.442695
        %v1675 = vpow.pop %v1674
        %v1676 = vmul.f32 %v1669, 1.442695
        %v1677 = vpow.pop %v1676
        %v1678 = vmul.f32 %v1659, 0.0
        %v1679 = vmul.f32 %v1661, 0.0
        %v1680 = vmul.f32 %v1663, 0.0
        %v1681 = vmul.f32 %v1665, 0.0
        %v1682 = vsel %vm1641, %v1671, 0.0
        %1683 = vadd.xlane.f32.xlu0 %v1682
        %v1684 = vpop.xlane.xlu0 %1683
        %v1685 = vsel %vm1641, %v1673, 0.0
        %1686 = vadd.xlane.f32.xlu0 %v1685
        %v1687 = vpop.xlane.xlu0 %1686
        %v1688 = vsel %vm1641, %v1675, 0.0
        %1689 = vadd.xlane.f32.xlu0 %v1688
        %v1690 = vpop.xlane.xlu0 %1689
        %v1691 = vsel %vm1641, %v1677, 0.0
        %1692 = vadd.xlane.f32.xlu0 %v1691
        %v1693 = vpop.xlane.xlu0 %1692
        %v1694 = vadd.f32 %v1678, %v1684
        %v1695 = vadd.f32 %v1679, %v1687
        %v1696 = vadd.f32 %v1680, %v1690
        %v1697 = vadd.f32 %v1681, %v1693
        %v1698 = vpack.c.bf16 %v1671, %v1671
        %v1699 = vpack.c.bf16 %v1673, %v1673
        %v1700 = vpack.c.bf16 %v1675, %v1675
        %v1701 = vpack.c.bf16 %v1677, %v1677
        %v1703 = vsel %vm1641, %v1698, 0
        %vm1705 = vcmask 1043456
        %v1707 = vsel %vm1705, %v1452, 0
        %1709 = vmatprep.subr.bf16.mxu0 0
        %1710 = vmatpush1.bf16.msra.mxu0 %v1707
        %1711 = vmatprep.subr.bf16.mxu0 0
        %1712 = vmatpush1.bf16.msra.mxu0 0
        %1713 = vmatprep.subr.bf16.mxu0 0
        %1714 = vmatpush1.bf16.msra.mxu0 0
        %1715 = vmatprep.subr.bf16.mxu0 0
        %1716 = vmatpush1.bf16.msra.mxu0 0
        %1717 = vmatprep.subr.bf16.mxu0 0
        %1718 = vmatpush1.bf16.msra.mxu0 0
        %1719 = vmatprep.subr.bf16.mxu0 0
        %1720 = vmatpush1.bf16.msra.mxu0 0
        %1721 = vmatprep.subr.bf16.mxu0 0
        %1722 = vmatpush1.bf16.msra.mxu0 0
        %1723 = vmatprep.subr.bf16.mxu0 0
        %1724 = vmatpush1.bf16.msra.mxu0 0
        %1725 = vmatprep.subr.bf16.mxu0 0
        %1726 = vmatpush1.bf16.msra.mxu0 0
        %1727 = vmatprep.subr.bf16.mxu0 0
        %1728 = vmatpush1.bf16.msra.mxu0 0
        %1729 = vmatprep.subr.bf16.mxu0 0
        %1730 = vmatpush1.bf16.msra.mxu0 0
        %1731 = vmatprep.subr.bf16.mxu0 0
        %1732 = vmatpush1.bf16.msra.mxu0 0
        %1733 = vmatprep.subr.bf16.mxu0 0
        %1734 = vmatpush1.bf16.msra.mxu0 0
        %1735 = vmatprep.subr.bf16.mxu0 0
        %1736 = vmatpush1.bf16.msra.mxu0 0
        %1737 = vmatprep.subr.bf16.mxu0 0
        %1738 = vmatpush1.bf16.msra.mxu0 0
        %1739 = vmatprep.subr.bf16.mxu0 0
        %1740 = vmatpush1.bf16.msra.mxu0 0
        %1741 = vmatprep.mubr.bf16.mxu0 0
        %1742 = vmatmul.mubr.bf16.gmra.mrb[0].mxu0 %v1703
        %v1743 = vpop.f32.mrb[0].mxu0
        %v1744 = vadd.f32 0.0, %v1743
        %v1745 = vpop.f32.mrb[0].mxu0
        %v1746 = vpop.f32.mrb[0].mxu0
        %v1747 = vpop.f32.mrb[0].mxu0
        %1748 = vdwg.mxu0
        %v1750 = vsel %vm1641, %v1699, 0
        %v1753 = vsel %vm1705, %v1453, 0
        %1755 = vmatprep.subr.bf16.mxu0 0
        %1756 = vmatpush1.bf16.msra.mxu0 %v1753
        %1757 = vmatprep.subr.bf16.mxu0 0
        %1758 = vmatpush1.bf16.msra.mxu0 0
        %1759 = vmatprep.subr.bf16.mxu0 0
        %1760 = vmatpush1.bf16.msra.mxu0 0
        %1761 = vmatprep.subr.bf16.mxu0 0
        %1762 = vmatpush1.bf16.msra.mxu0 0
        %1763 = vmatprep.subr.bf16.mxu0 0
        %1764 = vmatpush1.bf16.msra.mxu0 0
        %1765 = vmatprep.subr.bf16.mxu0 0
        %1766 = vmatpush1.bf16.msra.mxu0 0
        %1767 = vmatprep.subr.bf16.mxu0 0
        %1768 = vmatpush1.bf16.msra.mxu0 0
        %1769 = vmatprep.subr.bf16.mxu0 0
        %1770 = vmatpush1.bf16.msra.mxu0 0
        %1771 = vmatprep.subr.bf16.mxu0 0
        %1772 = vmatpush1.bf16.msra.mxu0 0
        %1773 = vmatprep.subr.bf16.mxu0 0
        %1774 = vmatpush1.bf16.msra.mxu0 0
        %1775 = vmatprep.subr.bf16.mxu0 0
        %1776 = vmatpush1.bf16.msra.mxu0 0
        %1777 = vmatprep.subr.bf16.mxu0 0
        %1778 = vmatpush1.bf16.msra.mxu0 0
        %1779 = vmatprep.subr.bf16.mxu0 0
        %1780 = vmatpush1.bf16.msra.mxu0 0
        %1781 = vmatprep.subr.bf16.mxu0 0
        %1782 = vmatpush1.bf16.msra.mxu0 0
        %1783 = vmatprep.subr.bf16.mxu0 0
        %1784 = vmatpush1.bf16.msra.mxu0 0
        %1785 = vmatprep.subr.bf16.mxu0 0
        %1786 = vmatpush1.bf16.msra.mxu0 0
        %1787 = vmatprep.mubr.bf16.mxu0 0
        %1788 = vmatmul.mubr.bf16.gmra.mrb[0].mxu0 %v1750
        %v1789 = vpop.f32.mrb[0].mxu0
        %v1790 = vadd.f32 0.0, %v1789
        %v1791 = vpop.f32.mrb[0].mxu0
        %v1792 = vpop.f32.mrb[0].mxu0
        %v1793 = vpop.f32.mrb[0].mxu0
        %1794 = vdwg.mxu0
        %v1796 = vsel %vm1641, %v1700, 0
        %v1799 = vsel %vm1705, %v1454, 0
        %1801 = vmatprep.subr.bf16.mxu0 0
        %1802 = vmatpush1.bf16.msra.mxu0 %v1799
        %1803 = vmatprep.subr.bf16.mxu0 0
        %1804 = vmatpush1.bf16.msra.mxu0 0
        %1805 = vmatprep.subr.bf16.mxu0 0
        %1806 = vmatpush1.bf16.msra.mxu0 0
        %1807 = vmatprep.subr.bf16.mxu0 0
        %1808 = vmatpush1.bf16.msra.mxu0 0
        %1809 = vmatprep.subr.bf16.mxu0 0
        %1810 = vmatpush1.bf16.msra.mxu0 0
        %1811 = vmatprep.subr.bf16.mxu0 0
        %1812 = vmatpush1.bf16.msra.mxu0 0
        %1813 = vmatprep.subr.bf16.mxu0 0
        %1814 = vmatpush1.bf16.msra.mxu0 0
        %1815 = vmatprep.subr.bf16.mxu0 0
        %1816 = vmatpush1.bf16.msra.mxu0 0
        %1817 = vmatprep.subr.bf16.mxu0 0
        %1818 = vmatpush1.bf16.msra.mxu0 0
        %1819 = vmatprep.subr.bf16.mxu0 0
        %1820 = vmatpush1.bf16.msra.mxu0 0
        %1821 = vmatprep.subr.bf16.mxu0 0
        %1822 = vmatpush1.bf16.msra.mxu0 0
        %1823 = vmatprep.subr.bf16.mxu0 0
        %1824 = vmatpush1.bf16.msra.mxu0 0
        %1825 = vmatprep.subr.bf16.mxu0 0
        %1826 = vmatpush1.bf16.msra.mxu0 0
        %1827 = vmatprep.subr.bf16.mxu0 0
        %1828 = vmatpush1.bf16.msra.mxu0 0
        %1829 = vmatprep.subr.bf16.mxu0 0
        %1830 = vmatpush1.bf16.msra.mxu0 0
        %1831 = vmatprep.subr.bf16.mxu0 0
        %1832 = vmatpush1.bf16.msra.mxu0 0
        %1833 = vmatprep.mubr.bf16.mxu0 0
        %1834 = vmatmul.mubr.bf16.gmra.mrb[0].mxu0 %v1796
        %v1835 = vpop.f32.mrb[0].mxu0
        %v1836 = vadd.f32 0.0, %v1835
        %v1837 = vpop.f32.mrb[0].mxu0
        %v1838 = vpop.f32.mrb[0].mxu0
        %v1839 = vpop.f32.mrb[0].mxu0
        %1840 = vdwg.mxu0
        %v1842 = vsel %vm1641, %v1701, 0
        %v1845 = vsel %vm1705, %v1455, 0
        %1847 = vmatprep.subr.bf16.mxu0 0
        %1848 = vmatpush1.bf16.msra.mxu0 %v1845
        %1849 = vmatprep.subr.bf16.mxu0 0
        %1850 = vmatpush1.bf16.msra.mxu0 0
        %1851 = vmatprep.subr.bf16.mxu0 0
        %1852 = vmatpush1.bf16.msra.mxu0 0
        %1853 = vmatprep.subr.bf16.mxu0 0
        %1854 = vmatpush1.bf16.msra.mxu0 0
        %1855 = vmatprep.subr.bf16.mxu0 0
        %1856 = vmatpush1.bf16.msra.mxu0 0
        %1857 = vmatprep.subr.bf16.mxu0 0
        %1858 = vmatpush1.bf16.msra.mxu0 0
        %1859 = vmatprep.subr.bf16.mxu0 0
        %1860 = vmatpush1.bf16.msra.mxu0 0
        %1861 = vmatprep.subr.bf16.mxu0 0
        %1862 = vmatpush1.bf16.msra.mxu0 0
        %1863 = vmatprep.subr.bf16.mxu0 0
        %1864 = vmatpush1.bf16.msra.mxu0 0
        %1865 = vmatprep.subr.bf16.mxu0 0
        %1866 = vmatpush1.bf16.msra.mxu0 0
        %1867 = vmatprep.subr.bf16.mxu0 0
        %1868 = vmatpush1.bf16.msra.mxu0 0
        %1869 = vmatprep.subr.bf16.mxu0 0
        %1870 = vmatpush1.bf16.msra.mxu0 0
        %1871 = vmatprep.subr.bf16.mxu0 0
        %1872 = vmatpush1.bf16.msra.mxu0 0
        %1873 = vmatprep.subr.bf16.mxu0 0
        %1874 = vmatpush1.bf16.msra.mxu0 0
        %1875 = vmatprep.subr.bf16.mxu0 0
        %1876 = vmatpush1.bf16.msra.mxu0 0
        %1877 = vmatprep.subr.bf16.mxu0 0
        %1878 = vmatpush1.bf16.msra.mxu0 0
        %1879 = vmatprep.mubr.bf16.mxu0 0
        %1880 = vmatmul.mubr.bf16.gmra.mrb[0].mxu0 %v1842
        %v1881 = vpop.f32.mrb[0].mxu0
        %v1882 = vadd.f32 0.0, %v1881
        %v1883 = vpop.f32.mrb[0].mxu0
        %v1884 = vpop.f32.mrb[0].mxu0
        %v1885 = vpop.f32.mrb[0].mxu0
        %1886 = vdwg.mxu0
        %v1887 = vadd.f32 %v1678, %v1744
        %v1888 = vadd.f32 %v1679, %v1790
        %v1889 = vadd.f32 %v1680, %v1836
        %v1890 = vadd.f32 %v1681, %v1882
        %v1891 = vrcp.pop %v1694
        %v1892 = vrcp.pop %v1695
        %v1893 = vrcp.pop %v1696
        %v1894 = vrcp.pop %v1697
        %v1895 = vmul.f32 %v1887, %v1891
        %v1896 = vmul.f32 %v1888, %v1892
        %v1897 = vmul.f32 %v1889, %v1893
        %v1898 = vmul.f32 %v1890, %v1894
        %v1899 = vcombine.low %v1895, %v1897
        %v1900 = vcombine.high %v1895, %v1897
        %v1902 = vunpack.c.l.s4 1983009808
        %v1903 = vunpack.c.0.s8 %v1902
        %v1904 = vlaneseq
        %v1905 = vshrl.u32 %v1904, 7
        %v1906 = vsub.s32 %v1903, %v1905
        %v1907 = vrot.slane %v1899, %v1906
        %v1909 = vunpack.c.l.s4 1983009808
        %v1910 = vunpack.c.0.s8 %v1909
        %v1911 = vlaneseq
        %v1912 = vshrl.u32 %v1911, 7
        %v1913 = vsub.s32 %v1910, %v1912
        %v1914 = vrot.slane %v1900, %v1913
        %v1915 = vcombine.low %v1896, %v1898
        %v1916 = vcombine.high %v1896, %v1898
        %v1918 = vunpack.c.l.s4 1983009808
        %v1919 = vunpack.c.0.s8 %v1918
        %v1920 = vlaneseq
        %v1921 = vshrl.u32 %v1920, 7
        %v1922 = vsub.s32 %v1919, %v1921
        %v1923 = vrot.slane %v1915, %v1922
        %v1925 = vunpack.c.l.s4 1983009808
        %v1926 = vunpack.c.0.s8 %v1925
        %v1927 = vlaneseq
        %v1928 = vshrl.u32 %v1927, 7
        %v1929 = vsub.s32 %v1926, %v1928
        %v1930 = vrot.slane %v1916, %v1929
        %v1931 = vcombine.low %v1907, %v1923
        %v1932 = vcombine.high %v1907, %v1923
        %v1934 = vunpack.c.l.s4 1934713408
        %v1935 = vunpack.c.0.s8 %v1934
        %v1936 = vlaneseq
        %v1937 = vshrl.u32 %v1936, 7
        %v1938 = vsub.s32 %v1935, %v1937
        %v1939 = vrot.slane %v1931, %v1938
        %v1941 = vunpack.c.l.s4 1934713408
        %v1942 = vunpack.c.0.s8 %v1941
        %v1943 = vlaneseq
        %v1944 = vshrl.u32 %v1943, 7
        %v1945 = vsub.s32 %v1942, %v1944
        %v1946 = vrot.slane %v1932, %v1945
        %v1947 = vcombine.low %v1914, %v1930
        %v1948 = vcombine.high %v1914, %v1930
        %v1950 = vunpack.c.l.s4 1934713408
        %v1951 = vunpack.c.0.s8 %v1950
        %v1952 = vlaneseq
        %v1953 = vshrl.u32 %v1952, 7
        %v1954 = vsub.s32 %v1951, %v1953
        %v1955 = vrot.slane %v1947, %v1954
        %v1957 = vunpack.c.l.s4 1934713408
        %v1958 = vunpack.c.0.s8 %v1957
        %v1959 = vlaneseq
        %v1960 = vshrl.u32 %v1959, 7
        %v1961 = vsub.s32 %v1958, %v1960
        %v1962 = vrot.slane %v1948, %v1961
        %v1963 = vcombine.high %v1939, 0.0
        %v1964 = vcombine.high %v1946, 0.0
        %v1965 = vcombine.high %v1955, 0.0
        %v1966 = vcombine.high %v1962, 0.0
        %v1967 = vcombine.low %v1939, %v1946
        %v1969 = vunpack.c.l.s4 1983009808
        %v1970 = vunpack.c.0.s8 %v1969
        %v1971 = vlaneseq
        %v1972 = vshrl.u32 %v1971, 7
        %v1973 = vsub.s32 %v1970, %v1972
        %v1974 = vrot.slane %v1967, %v1973
        %v1975 = vcombine.low %v1963, %v1964
        %v1977 = vunpack.c.l.s4 1983009808
        %v1978 = vunpack.c.0.s8 %v1977
        %v1979 = vlaneseq
        %v1980 = vshrl.u32 %v1979, 7
        %v1981 = vsub.s32 %v1978, %v1980
        %v1982 = vrot.slane %v1975, %v1981
        %v1983 = vcombine.low %v1955, %v1962
        %v1985 = vunpack.c.l.s4 1983009808
        %v1986 = vunpack.c.0.s8 %v1985
        %v1987 = vlaneseq
        %v1988 = vshrl.u32 %v1987, 7
        %v1989 = vsub.s32 %v1986, %v1988
        %v1990 = vrot.slane %v1983, %v1989
        %v1991 = vcombine.low %v1965, %v1966
        %v1993 = vunpack.c.l.s4 1983009808
        %v1994 = vunpack.c.0.s8 %v1993
        %v1995 = vlaneseq
        %v1996 = vshrl.u32 %v1995, 7
        %v1997 = vsub.s32 %v1994, %v1996
        %v1998 = vrot.slane %v1991, %v1997
        %v1999 = vcombine.low %v1974, %v1982
        %v2000 = vcombine.high %v1974, %v1982
        %v2002 = vunpack.c.l.s4 1934713408
        %v2003 = vunpack.c.0.s8 %v2002
        %v2004 = vlaneseq
        %v2005 = vshrl.u32 %v2004, 7
        %v2006 = vsub.s32 %v2003, %v2005
        %v2007 = vrot.slane %v1999, %v2006
        %v2009 = vunpack.c.l.s4 1934713408
        %v2010 = vunpack.c.0.s8 %v2009
        %v2011 = vlaneseq
        %v2012 = vshrl.u32 %v2011, 7
        %v2013 = vsub.s32 %v2010, %v2012
        %v2014 = vrot.slane %v2000, %v2013
        %v2015 = vcombine.low %v1990, %v1998
        %v2016 = vcombine.high %v1990, %v1998
        %v2018 = vunpack.c.l.s4 1934713408
        %v2019 = vunpack.c.0.s8 %v2018
        %v2020 = vlaneseq
        %v2021 = vshrl.u32 %v2020, 7
        %v2022 = vsub.s32 %v2019, %v2021
        %v2023 = vrot.slane %v2015, %v2022
        %v2025 = vunpack.c.l.s4 1934713408
        %v2026 = vunpack.c.0.s8 %v2025
        %v2027 = vlaneseq
        %v2028 = vshrl.u32 %v2027, 7
        %v2029 = vsub.s32 %v2026, %v2028
        %v2030 = vrot.slane %v2016, %v2029
        %v2031 = vcombine.low %v2007, %v2023
        %v2032 = vcombine.high %v2007, %v2023
        %v2033 = vcombine.low %v2014, %v2030
        %v2034 = vcombine.high %v2014, %v2030
        %2036 = vrot.lane.b32.xlu0 %v2032, 32
        %v2037 = vpop.permute.xlu0 %2036
        %2040 = vrot.lane.b32.xlu0 %v2033, 64
        %v2041 = vpop.permute.xlu0 %2040
        %2044 = vrot.lane.b32.xlu0 %v2034, 96
        %v2045 = vpop.permute.xlu0 %2044
        %v2047 = vsel %vm1456, %v2031, %v2037
        %vm2048 = vcmask 523264
        %v2049 = vsel %vm2048, %v2047, %v2041
        %vm2050 = vcmask 785408
        %v2051 = vsel %vm2050, %v2049, %v2045
        %v2052 = vpack.c.bf16 %v2051, %v2051
        %v2053 = vld [vmem:[#allocation10] sm:$0xf]
        %v2054 = vld [vmem:[#allocation10 + $0x4] sm:$0xf]
        %v2055 = vld [vmem:[#allocation10 + $0x8] sm:$0xf]
        %v2056 = vld [vmem:[#allocation10 + $0xc] sm:$0xf]
        %v2057 = vld [vmem:[#allocation10 + $0x10] sm:$0xf]
        %v2058 = vld [vmem:[#allocation10 + $0x14] sm:$0xf]
        %v2059 = vld [vmem:[#allocation10 + $0x18] sm:$0xf]
        %v2060 = vld [vmem:[#allocation10 + $0x1c] sm:$0xf]
        %v2061 = vld [vmem:[#allocation10 + $0x20] sm:$0xf]
        %v2062 = vld [vmem:[#allocation10 + $0x24] sm:$0xf]
        %v2063 = vld [vmem:[#allocation10 + $0x28] sm:$0xf]
        %v2064 = vld [vmem:[#allocation10 + $0x2c] sm:$0xf]
        %v2065 = vld [vmem:[#allocation10 + $0x30] sm:$0xf]
        %v2066 = vld [vmem:[#allocation10 + $0x34] sm:$0xf]
        %v2067 = vld [vmem:[#allocation10 + $0x38] sm:$0xf]
        %v2068 = vld [vmem:[#allocation10 + $0x3c] sm:$0xf]
        %v2069 = vld [vmem:[%s8] sm:$0x1]
        %v2071 = vlaneseq
        %v2072 = vshrl.u32 %v2071, 7
        %v2073 = vsub.s32 0, %v2072
        %v2074 = vrot.slane %v2069, %v2073
        %v2092 = vunpack.c.l.b16 %v2053
        %v2093 = vunpack.c.l.b16 %v2054
        %v2094 = vunpack.c.l.b16 %v2055
        %v2095 = vunpack.c.l.b16 %v2056
        %v2096 = vunpack.c.l.b16 %v2057
        %v2097 = vunpack.c.l.b16 %v2058
        %v2098 = vunpack.c.l.b16 %v2059
        %v2099 = vunpack.c.l.b16 %v2060
        %v2100 = vunpack.c.l.b16 %v2061
        %v2101 = vunpack.c.l.b16 %v2062
        %v2102 = vunpack.c.l.b16 %v2063
        %v2103 = vunpack.c.l.b16 %v2064
        %v2104 = vunpack.c.l.b16 %v2065
        %v2105 = vunpack.c.l.b16 %v2066
        %v2106 = vunpack.c.l.b16 %v2067
        %v2107 = vunpack.c.l.b16 %v2068
        %v2108 = vpack.c.b16 %v2093, %v2092
        %v2109 = vpack.c.b16 %v2095, %v2094
        %v2110 = vpack.c.b16 %v2097, %v2096
        %v2111 = vpack.c.b16 %v2099, %v2098
        %v2112 = vpack.c.b16 %v2101, %v2100
        %v2113 = vpack.c.b16 %v2103, %v2102
        %v2114 = vpack.c.b16 %v2105, %v2104
        %v2115 = vpack.c.b16 %v2107, %v2106
        %2124 = vmatprep.subr.bf16.mxu0 0
        %2125 = vmatpush1.bf16.msra.mxu0 %v2108
        %2126 = vmatprep.subr.bf16.mxu0 0
        %2127 = vmatpush1.bf16.msra.mxu0 %v2109
        %2128 = vmatprep.subr.bf16.mxu0 0
        %2129 = vmatpush1.bf16.msra.mxu0 %v2110
        %2130 = vmatprep.subr.bf16.mxu0 0
        %2131 = vmatpush1.bf16.msra.mxu0 %v2111
        %2132 = vmatprep.subr.bf16.mxu0 0
        %2133 = vmatpush1.bf16.msra.mxu0 %v2112
        %2134 = vmatprep.subr.bf16.mxu0 0
        %2135 = vmatpush1.bf16.msra.mxu0 %v2113
        %2136 = vmatprep.subr.bf16.mxu0 0
        %2137 = vmatpush1.bf16.msra.mxu0 %v2114
        %2138 = vmatprep.subr.bf16.mxu0 0
        %2139 = vmatpush1.bf16.msra.mxu0 %v2115
        %2140 = vmatprep.subr.bf16.mxu0 0
        %2141 = vmatpush1.bf16.msra.mxu0 0
        %2142 = vmatprep.subr.bf16.mxu0 0
        %2143 = vmatpush1.bf16.msra.mxu0 0
        %2144 = vmatprep.subr.bf16.mxu0 0
        %2145 = vmatpush1.bf16.msra.mxu0 0
        %2146 = vmatprep.subr.bf16.mxu0 0
        %2147 = vmatpush1.bf16.msra.mxu0 0
        %2148 = vmatprep.subr.bf16.mxu0 0
        %2149 = vmatpush1.bf16.msra.mxu0 0
        %2150 = vmatprep.subr.bf16.mxu0 0
        %2151 = vmatpush1.bf16.msra.mxu0 0
        %2152 = vmatprep.subr.bf16.mxu0 0
        %2153 = vmatpush1.bf16.msra.mxu0 0
        %2154 = vmatprep.subr.bf16.mxu0 0
        %2155 = vmatpush1.bf16.msra.mxu0 0
        %2156 = vmatprep.mubr.bf16.mxu0 0
        %2157 = vmatmul.mubr.bf16.gmra.mrb[0].mxu0 %v2052
        %v2158 = vpop.f32.mrb[0].mxu0
        %v2159 = vadd.f32 %v2074, %v2158
        %v2160 = vpop.f32.mrb[0].mxu0
        %v2161 = vpop.f32.mrb[0].mxu0
        %v2162 = vpop.f32.mrb[0].mxu0
        %2163 = vdwg.mxu0
        %v2164 = vadd.f32 %v2159, %v668
        %v2165 = vld [vmem:[%s9] sm:$0x1]
        %v2166 = vld [vmem:[%s10] sm:$0x1]
        %2167 = vadd.xlane.f32.xlu0 %v2164
        %v2168 = vpop.xlane.xlu0 %2167
        %v2169 = vrcp.pop 128.0
        %v2170 = vmul.f32 %v2168, %v2169
        %v2171 = vsub.f32 %v2164, %v2170
        %v2172 = vmul.f32 %v2171, %v2171
        %2173 = vadd.xlane.f32.xlu0 %v2172
        %v2174 = vpop.xlane.xlu0 %2173
        %v2175 = vmul.f32 %v2174, %v2169
        %v2176 = vadd.f32 %v2175, 1e-05
        %v2177 = vrsqrt.pop %v2176
        %v2178 = vmul.f32 %v2171, %v2177
        %v2180 = vlaneseq
        %v2181 = vshrl.u32 %v2180, 7
        %v2182 = vsub.s32 0, %v2181
        %v2183 = vrot.slane %v2165, %v2182
        %v2185 = vmul.f32 %v2178, %v2183
        %v2187 = vlaneseq
        %v2188 = vshrl.u32 %v2187, 7
        %v2189 = vsub.s32 0, %v2188
        %v2190 = vrot.slane %v2166, %v2189
        %v2192 = vadd.f32 %v2185, %v2190
        %v2193 = vpack.c.bf16 %v2192, %v2192
        %v2194 = vld [vmem:[#allocation11] sm:$0xff]
        %v2195 = vld [vmem:[#allocation11 + $0x8] sm:$0xff]
        %v2196 = vld [vmem:[#allocation11 + $0x10] sm:$0xff]
        %v2197 = vld [vmem:[#allocation11 + $0x18] sm:$0xff]
        %v2198 = vld [vmem:[#allocation11 + $0x20] sm:$0xff]
        %v2199 = vld [vmem:[#allocation11 + $0x28] sm:$0xff]
        %v2200 = vld [vmem:[#allocation11 + $0x30] sm:$0xff]
        %v2201 = vld [vmem:[#allocation11 + $0x38] sm:$0xff]
        %v2202 = vld [vmem:[#allocation11 + $0x40] sm:$0xff]
        %v2203 = vld [vmem:[#allocation11 + $0x48] sm:$0xff]
        %v2204 = vld [vmem:[#allocation11 + $0x50] sm:$0xff]
        %v2205 = vld [vmem:[#allocation11 + $0x58] sm:$0xff]
        %v2206 = vld [vmem:[#allocation11 + $0x60] sm:$0xff]
        %v2207 = vld [vmem:[#allocation11 + $0x68] sm:$0xff]
        %v2208 = vld [vmem:[#allocation11 + $0x70] sm:$0xff]
        %v2209 = vld [vmem:[#allocation11 + $0x78] sm:$0xff]
        %v2210 = vld [vmem:[%s12] sm:$0x3]
        %v2212 = vlaneseq
        %v2213 = vshrl.u32 %v2212, 7
        %v2214 = vsub.s32 0, %v2213
        %v2215 = vrot.slane %v2210, %v2214
        %v2216 = vlaneseq
        %v2217 = vshrl.u32 %v2216, 7
        %v2218 = vsub.s32 1, %v2217
        %v2219 = vrot.slane %v2210, %v2218
        %v2238 = vunpack.c.l.b16 %v2194
        %v2239 = vunpack.c.h.b16 %v2194
        %v2240 = vunpack.c.l.b16 %v2195
        %v2241 = vunpack.c.h.b16 %v2195
        %v2242 = vunpack.c.l.b16 %v2196
        %v2243 = vunpack.c.h.b16 %v2196
        %v2244 = vunpack.c.l.b16 %v2197
        %v2245 = vunpack.c.h.b16 %v2197
        %v2246 = vunpack.c.l.b16 %v2198
        %v2247 = vunpack.c.h.b16 %v2198
        %v2248 = vunpack.c.l.b16 %v2199
        %v2249 = vunpack.c.h.b16 %v2199
        %v2250 = vunpack.c.l.b16 %v2200
        %v2251 = vunpack.c.h.b16 %v2200
        %v2252 = vunpack.c.l.b16 %v2201
        %v2253 = vunpack.c.h.b16 %v2201
        %v2254 = vunpack.c.l.b16 %v2202
        %v2255 = vunpack.c.h.b16 %v2202
        %v2256 = vunpack.c.l.b16 %v2203
        %v2257 = vunpack.c.h.b16 %v2203
        %v2258 = vunpack.c.l.b16 %v2204
        %v2259 = vunpack.c.h.b16 %v2204
        %v2260 = vunpack.c.l.b16 %v2205
        %v2261 = vunpack.c.h.b16 %v2205
        %v2262 = vunpack.c.l.b16 %v2206
        %v2263 = vunpack.c.h.b16 %v2206
        %v2264 = vunpack.c.l.b16 %v2207
        %v2265 = vunpack.c.h.b16 %v2207
        %v2266 = vunpack.c.l.b16 %v2208
        %v2267 = vunpack.c.h.b16 %v2208
        %v2268 = vunpack.c.l.b16 %v2209
        %v2269 = vunpack.c.h.b16 %v2209
        %v2270 = vpack.c.b16 %v2240, %v2238
        %v2271 = vpack.c.b16 %v2241, %v2239
        %v2272 = vpack.c.b16 %v2244, %v2242
        %v2273 = vpack.c.b16 %v2245, %v2243
        %v2274 = vpack.c.b16 %v2248, %v2246
        %v2275 = vpack.c.b16 %v2249, %v2247
        %v2276 = vpack.c.b16 %v2252, %v2250
        %v2277 = vpack.c.b16 %v2253, %v2251
        %v2278 = vpack.c.b16 %v2256, %v2254
        %v2279 = vpack.c.b16 %v2257, %v2255
        %v2280 = vpack.c.b16 %v2260, %v2258
        %v2281 = vpack.c.b16 %v2261, %v2259
        %v2282 = vpack.c.b16 %v2264, %v2262
        %v2283 = vpack.c.b16 %v2265, %v2263
        %v2284 = vpack.c.b16 %v2268, %v2266
        %v2285 = vpack.c.b16 %v2269, %v2267
        %2302 = vmatprep.subr.bf16.mxu0 %v2271
        %2303 = vmatpush1.bf16.msra.mxu0 %v2270
        %2304 = vmatprep.subr.bf16.mxu0 %v2273
        %2305 = vmatpush1.bf16.msra.mxu0 %v2272
        %2306 = vmatprep.subr.bf16.mxu0 %v2275
        %2307 = vmatpush1.bf16.msra.mxu0 %v2274
        %2308 = vmatprep.subr.bf16.mxu0 %v2277
        %2309 = vmatpush1.bf16.msra.mxu0 %v2276
        %2310 = vmatprep.subr.bf16.mxu0 %v2279
        %2311 = vmatpush1.bf16.msra.mxu0 %v2278
        %2312 = vmatprep.subr.bf16.mxu0 %v2281
        %2313 = vmatpush1.bf16.msra.mxu0 %v2280
        %2314 = vmatprep.subr.bf16.mxu0 %v2283
        %2315 = vmatpush1.bf16.msra.mxu0 %v2282
        %2316 = vmatprep.subr.bf16.mxu0 %v2285
        %2317 = vmatpush1.bf16.msra.mxu0 %v2284
        %2318 = vmatprep.subr.bf16.mxu0 0
        %2319 = vmatpush1.bf16.msra.mxu0 0
        %2320 = vmatprep.subr.bf16.mxu0 0
        %2321 = vmatpush1.bf16.msra.mxu0 0
        %2322 = vmatprep.subr.bf16.mxu0 0
        %2323 = vmatpush1.bf16.msra.mxu0 0
        %2324 = vmatprep.subr.bf16.mxu0 0
        %2325 = vmatpush1.bf16.msra.mxu0 0
        %2326 = vmatprep.subr.bf16.mxu0 0
        %2327 = vmatpush1.bf16.msra.mxu0 0
        %2328 = vmatprep.subr.bf16.mxu0 0
        %2329 = vmatpush1.bf16.msra.mxu0 0
        %2330 = vmatprep.subr.bf16.mxu0 0
        %2331 = vmatpush1.bf16.msra.mxu0 0
        %2332 = vmatprep.subr.bf16.mxu0 0
        %2333 = vmatpush1.bf16.msra.mxu0 0
        %2334 = vmatprep.mubr.bf16.mxu0 0
        %2335 = vmatmul.mubr.bf16.gmra.mrb[0].mxu0 %v2193
        %v2336 = vpop.f32.mrb[0].mxu0
        %v2337 = vadd.f32 %v2215, %v2336
        %v2338 = vpop.f32.mrb[0].mxu0
        %v2339 = vadd.f32 %v2219, %v2338
        %v2340 = vpop.f32.mrb[0].mxu0
        %v2341 = vpop.f32.mrb[0].mxu0
        %2342 = vdwg.mxu0
        %v2343 = vmax.f32 %v2337, 0.0
        %v2344 = vmax.f32 %v2339, 0.0
        %v2345 = vpack.c.bf16 %v2343, %v2343
        %v2346 = vpack.c.bf16 %v2344, %v2344
        %v2347 = vld [vmem:[#allocation13] sm:$0xf]
        %v2348 = vld [vmem:[#allocation13 + $0x4] sm:$0xf]
        %v2349 = vld [vmem:[#allocation13 + $0x8] sm:$0xf]
        %v2350 = vld [vmem:[#allocation13 + $0xc] sm:$0xf]
        %v2351 = vld [vmem:[#allocation13 + $0x10] sm:$0xf]
        %v2352 = vld [vmem:[#allocation13 + $0x14] sm:$0xf]
        %v2353 = vld [vmem:[#allocation13 + $0x18] sm:$0xf]
        %v2354 = vld [vmem:[#allocation13 + $0x1c] sm:$0xf]
        %v2355 = vld [vmem:[#allocation13 + $0x20] sm:$0xf]
        %v2356 = vld [vmem:[#allocation13 + $0x24] sm:$0xf]
        %v2357 = vld [vmem:[#allocation13 + $0x28] sm:$0xf]
        %v2358 = vld [vmem:[#allocation13 + $0x2c] sm:$0xf]
        %v2359 = vld [vmem:[#allocation13 + $0x30] sm:$0xf]
        %v2360 = vld [vmem:[#allocation13 + $0x34] sm:$0xf]
        %v2361 = vld [vmem:[#allocation13 + $0x38] sm:$0xf]
        %v2362 = vld [vmem:[#allocation13 + $0x3c] sm:$0xf]
        %v2363 = vld [vmem:[#allocation13 + $0x40] sm:$0xf]
        %v2364 = vld [vmem:[#allocation13 + $0x44] sm:$0xf]
        %v2365 = vld [vmem:[#allocation13 + $0x48] sm:$0xf]
        %v2366 = vld [vmem:[#allocation13 + $0x4c] sm:$0xf]
        %v2367 = vld [vmem:[#allocation13 + $0x50] sm:$0xf]
        %v2368 = vld [vmem:[#allocation13 + $0x54] sm:$0xf]
        %v2369 = vld [vmem:[#allocation13 + $0x58] sm:$0xf]
        %v2370 = vld [vmem:[#allocation13 + $0x5c] sm:$0xf]
        %v2371 = vld [vmem:[#allocation13 + $0x60] sm:$0xf]
        %v2372 = vld [vmem:[#allocation13 + $0x64] sm:$0xf]
        %v2373 = vld [vmem:[#allocation13 + $0x68] sm:$0xf]
        %v2374 = vld [vmem:[#allocation13 + $0x6c] sm:$0xf]
        %v2375 = vld [vmem:[#allocation13 + $0x70] sm:$0xf]
        %v2376 = vld [vmem:[#allocation13 + $0x74] sm:$0xf]
        %v2377 = vld [vmem:[#allocation13 + $0x78] sm:$0xf]
        %v2378 = vld [vmem:[#allocation13 + $0x7c] sm:$0xf]
        %v2379 = vld [vmem:[%s14] sm:$0x1]
        %v2381 = vlaneseq
        %v2382 = vshrl.u32 %v2381, 7
        %v2383 = vsub.s32 0, %v2382
        %v2384 = vrot.slane %v2379, %v2383
        %v2418 = vunpack.c.l.b16 %v2347
        %v2419 = vunpack.c.l.b16 %v2348
        %v2420 = vunpack.c.l.b16 %v2349
        %v2421 = vunpack.c.l.b16 %v2350
        %v2422 = vunpack.c.l.b16 %v2351
        %v2423 = vunpack.c.l.b16 %v2352
        %v2424 = vunpack.c.l.b16 %v2353
        %v2425 = vunpack.c.l.b16 %v2354
        %v2426 = vunpack.c.l.b16 %v2355
        %v2427 = vunpack.c.l.b16 %v2356
        %v2428 = vunpack.c.l.b16 %v2357
        %v2429 = vunpack.c.l.b16 %v2358
        %v2430 = vunpack.c.l.b16 %v2359
        %v2431 = vunpack.c.l.b16 %v2360
        %v2432 = vunpack.c.l.b16 %v2361
        %v2433 = vunpack.c.l.b16 %v2362
        %v2434 = vunpack.c.l.b16 %v2363
        %v2435 = vunpack.c.l.b16 %v2364
        %v2436 = vunpack.c.l.b16 %v2365
        %v2437 = vunpack.c.l.b16 %v2366
        %v2438 = vunpack.c.l.b16 %v2367
        %v2439 = vunpack.c.l.b16 %v2368
        %v2440 = vunpack.c.l.b16 %v2369
        %v2441 = vunpack.c.l.b16 %v2370
        %v2442 = vunpack.c.l.b16 %v2371
        %v2443 = vunpack.c.l.b16 %v2372
        %v2444 = vunpack.c.l.b16 %v2373
        %v2445 = vunpack.c.l.b16 %v2374
        %v2446 = vunpack.c.l.b16 %v2375
        %v2447 = vunpack.c.l.b16 %v2376
        %v2448 = vunpack.c.l.b16 %v2377
        %v2449 = vunpack.c.l.b16 %v2378
        %v2450 = vpack.c.b16 %v2419, %v2418
        %v2451 = vpack.c.b16 %v2421, %v2420
        %v2452 = vpack.c.b16 %v2423, %v2422
        %v2453 = vpack.c.b16 %v2425, %v2424
        %v2454 = vpack.c.b16 %v2427, %v2426
        %v2455 = vpack.c.b16 %v2429, %v2428
        %v2456 = vpack.c.b16 %v2431, %v2430
        %v2457 = vpack.c.b16 %v2433, %v2432
        %v2458 = vpack.c.b16 %v2435, %v2434
        %v2459 = vpack.c.b16 %v2437, %v2436
        %v2460 = vpack.c.b16 %v2439, %v2438
        %v2461 = vpack.c.b16 %v2441, %v2440
        %v2462 = vpack.c.b16 %v2443, %v2442
        %v2463 = vpack.c.b16 %v2445, %v2444
        %v2464 = vpack.c.b16 %v2447, %v2446
        %v2465 = vpack.c.b16 %v2449, %v2448
        %2482 = vmatprep.subr.bf16.mxu0 0
        %2483 = vmatpush1.bf16.msra.mxu0 %v2450
        %2484 = vmatprep.subr.bf16.mxu0 0
        %2485 = vmatpush1.bf16.msra.mxu0 %v2451
        %2486 = vmatprep.subr.bf16.mxu0 0
        %2487 = vmatpush1.bf16.msra.mxu0 %v2452
        %2488 = vmatprep.subr.bf16.mxu0 0
        %2489 = vmatpush1.bf16.msra.mxu0 %v2453
        %2490 = vmatprep.subr.bf16.mxu0 0
        %2491 = vmatpush1.bf16.msra.mxu0 %v2454
        %2492 = vmatprep.subr.bf16.mxu0 0
        %2493 = vmatpush1.bf16.msra.mxu0 %v2455
        %2494 = vmatprep.subr.bf16.mxu0 0
        %2495 = vmatpush1.bf16.msra.mxu0 %v2456
        %2496 = vmatprep.subr.bf16.mxu0 0
        %2497 = vmatpush1.bf16.msra.mxu0 %v2457
        %2498 = vmatprep.subr.bf16.mxu0 0
        %2499 = vmatpush1.bf16.msra.mxu0 %v2458
        %2500 = vmatprep.subr.bf16.mxu0 0
        %2501 = vmatpush1.bf16.msra.mxu0 %v2459
        %2502 = vmatprep.subr.bf16.mxu0 0
        %2503 = vmatpush1.bf16.msra.mxu0 %v2460
        %2504 = vmatprep.subr.bf16.mxu0 0
        %2505 = vmatpush1.bf16.msra.mxu0 %v2461
        %2506 = vmatprep.subr.bf16.mxu0 0
        %2507 = vmatpush1.bf16.msra.mxu0 %v2462
        %2508 = vmatprep.subr.bf16.mxu0 0
        %2509 = vmatpush1.bf16.msra.mxu0 %v2463
        %2510 = vmatprep.subr.bf16.mxu0 0
        %2511 = vmatpush1.bf16.msra.mxu0 %v2464
        %2512 = vmatprep.subr.bf16.mxu0 0
        %2513 = vmatpush1.bf16.msra.mxu0 %v2465
        %2514 = vmatprep.mubr.bf16.mxu0 %v2346
        %2515 = vmatmul.mubr.bf16.gmra.mrb[0].mxu0 %v2345
        %v2516 = vpop.f32.mrb[0].mxu0
        %v2517 = vadd.f32 %v2384, %v2516
        %v2518 = vpop.f32.mrb[0].mxu0
        %v2519 = vpop.f32.mrb[0].mxu0
        %v2520 = vpop.f32.mrb[0].mxu0
        %2521 = vdwg.mxu0
        %v2522 = vadd.f32 %v2517, %v2517
        %v2523 = vld [vmem:[%s15] sm:$0x1]
        %v2524 = vld [vmem:[%s16] sm:$0x1]
        %2525 = vadd.xlane.f32.xlu0 %v2522
        %v2526 = vpop.xlane.xlu0 %2525
        %v2527 = vmul.f32 %v2526, %v2169
        %v2528 = vsub.f32 %v2522, %v2527
        %v2529 = vmul.f32 %v2528, %v2528
        %2530 = vadd.xlane.f32.xlu0 %v2529
        %v2531 = vpop.xlane.xlu0 %2530
        %v2532 = vmul.f32 %v2531, %v2169
        %v2533 = vadd.f32 %v2532, 1e-05
        %v2534 = vrsqrt.pop %v2533
        %v2535 = vmul.f32 %v2528, %v2534
        %v2537 = vlaneseq
        %v2538 = vshrl.u32 %v2537, 7
        %v2539 = vsub.s32 0, %v2538
        %v2540 = vrot.slane %v2523, %v2539
        %v2542 = vmul.f32 %v2535, %v2540
        %v2544 = vlaneseq
        %v2545 = vshrl.u32 %v2544, 7
        %v2546 = vsub.s32 0, %v2545
        %v2547 = vrot.slane %v2524, %v2546
        %v2549 = vadd.f32 %v2542, %v2547
        %2550 = vst [vmem:[%s664] sm:$0xff] %v2549
        %s2551 = sand.u32 %s421, 1
        %s2552 = scalar_lea.sflag [#allocation4], %s2551
        %s2553 = sand.u32 %s421, 1
        %s2554 = smul.addr %s2553, 8
        %s2555 = scalar_lea.vmem [#allocation14], %s2554
        // Predicated region
        $region117: #{tpu_custom_call.1} parent=87 // pred_check
          %p2556 = pneg %p431
        $region118: #{tpu_custom_call.1} parent=87 // pred_check_branch
          %2558 = sbr.rel (%p2556) target = $region120
        $region119: #{tpu_custom_call.1} parent=87 // pred_region
          %s2560 = ssub.s32 128, 128
          %2561 = vsyncadd %s2552, %s2560
          %s2562 = sadd.s32 %s42, %s41
          %s2563 = smul.addr %s2562, 128
          %s2564 = scalar_lea.hbm %s17, %s2563
          %s2566 = sshll.u32 %s2555, 4
          %s2567 = int_to_ptr.vmem [resolvable:$true] %s2566
          %2569 = dma.vmem_to_hbm [thread:$0]  %s2567, 128, %s2564, %s2552
        $region120: #{tpu_custom_call.1} parent=87 // pred_fallthru
          _
      $region88: #{tpu_custom_call.1} parent=5 // pred_fallthru
        _
      %p2570 = scmp.le.s32.totalorder 2, %s32
      // Predicated region
      $region121: #{tpu_custom_call.1} parent=5 // pred_check
        %p2571 = pneg %p2570
      $region122: #{tpu_custom_call.1} parent=5 // pred_check_branch
        %2573 = sbr.rel (%p2571) target = $region124
      $region123: #{tpu_custom_call.1} parent=5 // pred_region
        %s2574 = ssub.s32 %s32, 2
        // Predicated region
        $region125: #{tpu_custom_call.1} parent=123 // pred_check
          %p2575 = pneg %p437
        $region126: #{tpu_custom_call.1} parent=123 // pred_check_branch
          %2577 = sbr.rel (%p2575) target = $region128
        $region127: #{tpu_custom_call.1} parent=123 // pred_region
          %s2578 = sand.u32 %s422, 1
          %s2579 = scalar_lea.sflag [#allocation4], %s2578
          %s2580 = sand.u32 %s422, 1
          %s2581 = smul.addr %s2580, 8
          %s2582 = scalar_lea.vmem [#allocation14], %s2581
          %2583 = dma.done %s2579, 128
        $region128: #{tpu_custom_call.1} parent=123 // pred_fallthru
          _
      $region124: #{tpu_custom_call.1} parent=5 // pred_fallthru
        _
    $region6: #{tpu_custom_call.1} parent=1 // loop_footer
      %s36 = sadd.s32 1, %s32
    $region7: #{tpu_custom_call.1} parent=1 // loop_footer_branch
      %31 = sbr.rel target = $region3
    $region8: #{tpu_custom_call.1} parent=1 // loop_exit
      _
    %2584 = vsyncpa [#allocation3], 1
    %s2585 = scalar_lea.sflag [#allocation3], 1
    %2586 = vsyncpa %s2585, 1
    %2587 = vsyncpa [#allocation6], 1
    %2588 = vsyncpa [#allocation9], 1
    %2589 = vsyncpa [#allocation12], 1
    %2590 = vsyncpa [#allocation4], 1
    %s2591 = scalar_lea.sflag [#allocation4], 1
    %2592 = vsyncpa %s2591, 1

</llo_original>
